<compile_context>
chip_gen: v7x
topology: tpu7x:2x2x1
jax: 0.10.0
libtpu: 0.0.40
codegen_flags: <defaults>
</compile_context>

<pallas_src>
import jax
import jax.numpy as jnp
import numpy as np
from jax import lax
from jax.experimental import pallas as pl
from jax.experimental.pallas import tpu as pltpu

NEG_SLOPE = 0.2
BN_EPS = 1e-5
# MXU operand dtype. Kept f32 so the strict f32 reference check below passes;
# on v6e/v7x set to jnp.bfloat16 for the native-rate MXU path at realistic C
# (and loosen the test tolerance). BN / elementwise math stays f32 either way.
MATMUL_DTYPE = jnp.float32


def _round_up(n, m):
    return (n + m - 1) // m * m


def _lrelu(x):
    return jnp.where(x > 0, x, NEG_SLOPE * x)


# ----------------------------------------------------------------------------
# Fused Pallas kernel.
# Layout: 2-D (channels[sublane, padded to 8], B*T[lane]); lane index = b*T + t.
# ----------------------------------------------------------------------------
def _make_fused_kernel(B, T, Cp):
    N = B * T
    Th = T // 2

    def kernel(xcat_ref, condp_ref, d1resw_ref, cpw_ref,
               d2w_ref, b1w_ref, b2w_ref, u1w_ref, u2w_ref,
               vec_ref, out_ref):
        # time-within-batch index of every lane, even-lane mask, hoisted shift masks
        lane = lax.broadcasted_iota(jnp.int32, (1, N), 1)
        t_mod = lane % T
        even = (lane % 2) == 0
        m_p1 = t_mod >= 1
        m_n1 = t_mod < T - 1
        m_p2 = t_mod >= 2
        m_n2 = t_mod < T - 2

        # packed per-channel vectors: load once, slice in-register
        v = vec_ref[...]

        def col(j):
            return v[:, j:j + 1]                        # (Cp, 1)

        def roll(x, shift):
            # circular roll along lanes: out[j] = x[(j - shift) % N]
            return pltpu.roll(x, shift % N, axis=1)

        def shift_prev(x, s, m):
            # x[t - s] within each batch element, zero-padded where t < s
            return jnp.where(m, roll(x, s), 0.0)

        def shift_next(x, s, m):
            # x[t + s] within each batch element, zero-padded where t >= T - s
            return jnp.where(m, roll(x, -s), 0.0)

        def taps3(x, s, mp, mn):
            # [x_{t-s}; x_t; x_{t+s}] stacked on the contraction (sublane) axis
            return jnp.concatenate(
                [shift_prev(x, s, mp), x, shift_next(x, s, mn)], axis=0)

        def matmul(w_ref, rhs):
            return jnp.dot(w_ref[...].astype(MATMUL_DTYPE),
                           rhs.astype(MATMUL_DTYPE),
                           preferred_element_type=jnp.float32)

        def bn_lrelu(x, gamma, beta, mask, count):
            # BatchNorm1d (training mode, biased variance) in a single sweep,
            # variance clamped >= 0, then y = x*scale + offset and LeakyReLU.
            xm = x if mask is None else jnp.where(mask, x, 0.0)
            s1 = jnp.sum(xm, axis=1, keepdims=True)
            s2 = jnp.sum(xm * xm, axis=1, keepdims=True)
            mean = s1 * (1.0 / count)
            var = jnp.maximum(s2 * (1.0 / count) - mean * mean, 0.0)
            inv = lax.rsqrt(var + BN_EPS)
            scale = gamma * inv
            offset = beta - mean * scale
            return _lrelu(x * scale + offset)

        xcat = xcat_ref[...]

        # -------- down path: down1-conv1 fused with residual_conv (one matmul) ----
        fused = matmul(d1resw_ref, taps3(xcat, 1, m_p1, m_n1))   # (2*Cp, N)
        h = _lrelu(fused[:Cp] + col(1))                          # down1[0:2]
        resid = fused[Cp:] + col(0)                              # residual_conv
        h = _lrelu(matmul(d2w_ref, taps3(h, 1, m_p1, m_n1)) + col(2))  # down1[2:4]
        x1 = h + resid

        # -------- MaxPool1d(2,2), kept dilated: valid values live on even lanes ---
        xp = jnp.maximum(x1, roll(x1, -1))

        # -------- bottleneck at pooled resolution (stride-2 taps, even lanes) -----
        # conv biases before training-mode BN cancel exactly -> omitted.
        h = matmul(b1w_ref, taps3(xp, 2, m_p2, m_n2))
        h = bn_lrelu(h, col(4), col(5), even, float(B * Th))
        h = matmul(b2w_ref, taps3(h, 2, m_p2, m_n2))
        h = bn_lrelu(h, col(6), col(7), even, float(B * Th))
        bneck = h + matmul(cpw_ref, condp_ref[...]) + col(3)     # += cond_projection

        # -------- nearest x2 upsample: odd lanes copy their left (even) neighbour -
        x_up = jnp.where(even, bneck, roll(bneck, 1))

        # -------- up path: 6-block tap stack built directly from x1 / x_up --------
        u1_taps = jnp.concatenate(
            [shift_prev(x1, 1, m_p1), shift_prev(x_up, 1, m_p1),
             x1, x_up,
             shift_next(x1, 1, m_n1), shift_next(x_up, 1, m_n1)], axis=0)
        h = matmul(u1w_ref, u1_taps)                             # bias cancels in BN
        h = bn_lrelu(h, col(8), col(9), None, float(N))          # up_conv1
        h = matmul(u2w_ref, taps3(h, 1, m_p1, m_n1))             # bias cancels in BN
        out_ref[...] = bn_lrelu(h, col(10), col(11), None, float(N))  # up_conv2

    return kernel


# ----------------------------------------------------------------------------
# Wrapper: layout glue (reshape/transpose/pad/weight stacking) + one pallas_call
# ----------------------------------------------------------------------------
def trunc_residual_block_forward(x, cond_info, params):
    B, C, K, L = x.shape
    S = cond_info.shape[1]
    T = K * L
    assert T % 2 == 0, "MaxPool1d(2,2) / Upsample(x2) require an even K*L"
    N = B * T
    Th = T // 2
    dt = jnp.float32

    Cp = _round_up(C, 8)
    Sp = _round_up(S, 8)
    CSp = _round_up(C + S, 8)

    def pad2(w, rows, cols):
        return jnp.pad(w.astype(dt),
                       ((0, rows - w.shape[0]), (0, cols - w.shape[1])))

    def flatten_bt(a, rows):
        # (B, c, T) -> (rows, B*T): lane index = b*T + t, zero-padded channel rows.
        a2 = a.astype(dt).transpose(1, 0, 2).reshape(a.shape[1], B * T)
        return jnp.pad(a2, ((0, rows - a.shape[1]), (0, 0)))

    p = params

    # ---- activations (lane-dense, lane width = B*T) ----
    x_r = x.reshape(B, C, T)
    cond_r = cond_info.reshape(B, S, T)
    xcat = flatten_bt(jnp.concatenate([x_r, cond_r], axis=1), CSp)        # (CSp, N)
    # cond_info[:, :, :T//2] placed on even lanes ("dilated") to align with the
    # pooled stride-2 bottleneck layout. Pure layout prep (XLA), done once.
    cond_p = cond_r[:, :, :Th]
    cond_pd = jnp.stack([cond_p, jnp.zeros_like(cond_p)], axis=-1).reshape(B, S, T)
    cond_pd = flatten_bt(cond_pd, Sp)                                      # (Sp, N)

    # ---- weights: 3 taps stacked along the contraction axis, channel axes padded
    #      to multiples of 8 with zero rows/columns (mathematically a no-op). ----
    def stack_taps(w, cin_pad, groups=None):
        if groups is None:
            groups = [(0, w.shape[1], cin_pad)]
        blocks = []
        for k in range(3):
            for (lo, hi, gpad) in groups:
                blocks.append(pad2(w[:, lo:hi, k], Cp, gpad))
        return jnp.concatenate(blocks, axis=1)

    # residual_conv row-stacked under down1-conv1 (center-tap block only).
    d1_stack = stack_taps(p["d1_w"], CSp)                                  # (Cp, 3*CSp)
    res_rows = jnp.concatenate([jnp.zeros((Cp, CSp), dt),
                                pad2(p["res_w"], Cp, CSp),
                                jnp.zeros((Cp, CSp), dt)], axis=1)
    d1res_w = jnp.concatenate([d1_stack, res_rows], axis=0)                # (2*Cp, 3*CSp)

    cp_w = pad2(p["cp_w"], Cp, Sp)
    d2_w = stack_taps(p["d2_w"], Cp)
    b1_w = stack_taps(p["b1_w"], Cp)
    b2_w = stack_taps(p["b2_w"], Cp)
    # up_conv1 input is the in-kernel 6-block tap stack [x1; x_up] per tap.
    u1_w = stack_taps(p["u1_w"], None, groups=[(0, C, Cp), (C, 2 * C, Cp)])
    u2_w = stack_taps(p["u2_w"], Cp)

    # ---- per-channel vectors (biases feeding training-mode BN dropped: exact no-op)
    # cols: 0 res_b, 1 d1_b, 2 d2_b, 3 cp_b, 4 b1_g, 5 b1_beta, 6 b2_g, 7 b2_beta,
    #       8 u1_g, 9 u1_beta, 10 u2_g, 11 u2_beta
    vec = jnp.concatenate(
        [p["res_b"], p["d1_b"], p["d2_b"], p["cp_b"],
         p["b1_g"], p["b1_beta"], p["b2_g"], p["b2_beta"],
         p["u1_g"], p["u1_beta"], p["u2_g"], p["u2_beta"]], axis=1).astype(dt)
    vec = jnp.pad(vec, ((0, Cp - C), (0, 0)))                              # (Cp, 12)

    # ---- advisory cost estimate + explicit VMEM budget ----
    mm = (2 * Cp) * (3 * CSp) + 4 * Cp * (3 * Cp) + Cp * Sp + Cp * (6 * Cp)
    w_elems = (d1res_w.size + cp_w.size + d2_w.size + b1_w.size + b2_w.size
               + u1_w.size + u2_w.size + vec.size)
    cost = pl.CostEstimate(
        flops=int(2 * mm * N),
        transcendentals=int(4 * Cp),
        bytes_accessed=int(4 * (N * (CSp + Sp + Cp) + w_elems)))
    # rough live working set: in/out activations + tap concats + a few (Cp,N) temps
    work_bytes = 4 * N * (CSp + Sp + 3 * CSp + 6 * Cp + 10 * Cp) + 4 * w_elems
    # TODO(synk): re-derive per-tile budget (< ~48 MiB) once the lane axis is gridded
    # for v7x's 64 MiB VMEM / 2 TensorCores (needs the two-pass BN from the TODO above).
    vmem_limit = int(min(max(32 << 20, 2 * work_bytes), 96 << 20))

    vmem = pl.BlockSpec(memory_space=pltpu.MemorySpace.VMEM)
    out_flat = pl.pallas_call(
        _make_fused_kernel(B, T, Cp),
        out_shape=jax.ShapeDtypeStruct((Cp, N), dt),
        in_specs=[vmem] * 10,
        out_specs=vmem,
        cost_estimate=cost,
        compiler_params=pltpu.CompilerParams(vmem_limit_bytes=vmem_limit),
    )(xcat, cond_pd, d1res_w, cp_w, d2_w, b1_w, b2_w, u1_w, u2_w, vec)

    return out_flat[:C].reshape(C, B, T).transpose(1, 0, 2).reshape(B, C, K, L)


# ----------------------------------------------------------------------------
# Deterministic parameter init (shapes from the module __init__)
# ----------------------------------------------------------------------------
def init_params(key, C, S):
    ks = jax.random.split(key, 24)

    def w(i, shape, scale=0.1):
        return scale * jax.random.normal(ks[i], shape, dtype=jnp.float32)

    return {
        "res_w": w(0, (C, C + S)), "res_b": w(1, (C, 1)),            # Conv1d k=1
        "d1_w": w(2, (C, C + S, 3)), "d1_b": w(3, (C, 1)),           # down1 conv1
        "d2_w": w(4, (C, C, 3)), "d2_b": w(5, (C, 1)),               # down1 conv2
        "b1_w": w(6, (C, C, 3)), "b1_b": w(7, (C, 1)),               # bottleneck conv1
        "b1_g": 1.0 + w(8, (C, 1)), "b1_beta": w(9, (C, 1)),         # BN1
        "b2_w": w(10, (C, C, 3)), "b2_b": w(11, (C, 1)),             # bottleneck conv2
        "b2_g": 1.0 + w(12, (C, 1)), "b2_beta": w(13, (C, 1)),       # BN2
        "cp_w": w(14, (C, S)), "cp_b": w(15, (C, 1)),                # cond_projection
        "u1_w": w(16, (C, 2 * C, 3)), "u1_b": w(17, (C, 1)),         # up_conv1
        "u1_g": 1.0 + w(18, (C, 1)), "u1_beta": w(19, (C, 1)),
        "u2_w": w(20, (C, C, 3)), "u2_b": w(21, (C, 1)),             # up_conv2
        "u2_g": 1.0 + w(22, (C, 1)), "u2_beta": w(23, (C, 1)),
    }


# ----------------------------------------------------------------------------
# Independent pure-JAX reference (PyTorch semantics, training-mode BatchNorm).
# Still applies the conv biases the kernel omits, validating exact cancellation.
# ----------------------------------------------------------------------------
def _ref_conv1d(x, w, b, pad):
    out = lax.conv_general_dilated(x, w, window_strides=(1,),
                                   padding=((pad, pad),),
                                   dimension_numbers=("NCH", "OIH", "NCH"))
    return out + b.reshape(1, -1, 1)


def _ref_bn(x, g, b):
    mean = jnp.mean(x, axis=(0, 2), keepdims=True)
    var = jnp.mean(jnp.square(x - mean), axis=(0, 2), keepdims=True)
    return (g.reshape(1, -1, 1) * (x - mean) * lax.rsqrt(var + BN_EPS)
            + b.reshape(1, -1, 1))


def reference_forward(x, cond_info, p):
    B, C, K, L = x.shape
    S = cond_info.shape[1]
    T = K * L
    xr = x.reshape(B, C, T)
    cr = cond_info.reshape(B, S, T)
    xc = jnp.concatenate([xr, cr], axis=1)
    resid = _ref_conv1d(xc, p["res_w"][..., None], p["res_b"], 0)
    h = _lrelu(_ref_conv1d(xc, p["d1_w"], p["d1_b"], 1))
    h = _lrelu(_ref_conv1d(h, p["d2_w"], p["d2_b"], 1))
    x1 = h + resid
    xp = lax.reduce_window(x1, -jnp.inf, lax.max, (1, 1, 2), (1, 1, 2), "VALID")
    h = _lrelu(_ref_bn(_ref_conv1d(xp, p["b1_w"], p["b1_b"], 1),
                       p["b1_g"], p["b1_beta"]))
    h = _lrelu(_ref_bn(_ref_conv1d(h, p["b2_w"], p["b2_b"], 1),
                       p["b2_g"], p["b2_beta"]))
    cp = _ref_conv1d(cr[:, :, :h.shape[2]], p["cp_w"][..., None], p["cp_b"], 0)
    bneck = h + cp
    xu = jnp.repeat(bneck, 2, axis=-1)
    xu = jnp.concatenate([x1, xu], axis=1)
    xu = _lrelu(_ref_bn(_ref_conv1d(xu, p["u1_w"], p["u1_b"], 1),
                        p["u1_g"], p["u1_beta"]))
    xu = _lrelu(_ref_bn(_ref_conv1d(xu, p["u2_w"], p["u2_b"], 1),
                        p["u2_g"], p["u2_beta"]))
    return xu.reshape(B, C, K, L)


if __name__ == "__main__":
    key = jax.random.PRNGKey(0)
    kx, kc, kp = jax.random.split(key, 3)
    B, C, S, K, L = 2, 4, 6, 16, 16        # channels=4, side_dim=6, T=K*L=256
    x = jax.random.normal(kx, (B, C, K, L), dtype=jnp.float32)
    cond = jax.random.normal(kc, (B, S, K, L), dtype=jnp.float32)
    params = init_params(kp, C, S)

    out = jax.jit(trunc_residual_block_forward)(x, cond, params)
    out = jax.block_until_ready(out)
    assert out.shape == (B, C, K, L)

    ref = reference_forward(x, cond, params)
    np.testing.assert_allclose(np.asarray(out), np.asarray(ref),
                               rtol=1e-3, atol=1e-4)
    print("KERNEL_OK")
</pallas_src>

<mosaic_0001>
module attributes {stable_mosaic.version = 11 : i64} {
  func.func @kernel(%arg0: memref<16x512xf32, #tpu.memory_space<vmem>>, %arg1: memref<8x512xf32, #tpu.memory_space<vmem>>, %arg2: memref<16x48xf32, #tpu.memory_space<vmem>>, %arg3: memref<8x8xf32, #tpu.memory_space<vmem>>, %arg4: memref<8x24xf32, #tpu.memory_space<vmem>>, %arg5: memref<8x24xf32, #tpu.memory_space<vmem>>, %arg6: memref<8x24xf32, #tpu.memory_space<vmem>>, %arg7: memref<8x48xf32, #tpu.memory_space<vmem>>, %arg8: memref<8x24xf32, #tpu.memory_space<vmem>>, %arg9: memref<8x12xf32, #tpu.memory_space<vmem>>, %arg10: memref<8x512xf32, #tpu.memory_space<vmem>>) attributes {dimension_semantics = [], scalar_prefetch = 0 : i64, scratch_operands = 0 : i64, tpu.core_type = #tpu.core_type<tc>} {
    %0 = tpu.iota {dimensions = array<i32: 1>} : vector<1x512xi32>
    %c256_i32 = arith.constant 256 : i32
    %c0_i32 = arith.constant 0 : i32
    %1 = arith.cmpi eq, %c256_i32, %c0_i32 : i32
    %c1_i32 = arith.constant 1 : i32
    %2 = arith.select %1, %c1_i32, %c256_i32 : i32
    %3 = vector.broadcast %2 : i32 to vector<1x512xi32>
    %4 = arith.remsi %0, %3 : vector<1x512xi32>
    %c0_i32_0 = arith.constant 0 : i32
    %5 = vector.broadcast %c0_i32_0 : i32 to vector<1x512xi32>
    %6 = arith.cmpi ne, %4, %5 : vector<1x512xi32>
    %c0_i32_1 = arith.constant 0 : i32
    %7 = vector.broadcast %c0_i32_1 : i32 to vector<1x512xi32>
    %8 = arith.cmpi slt, %4, %7 : vector<1x512xi32>
    %c0_i32_2 = arith.constant 0 : i32
    %9 = arith.cmpi slt, %2, %c0_i32_2 : i32
    %10 = vector.broadcast %9 : i1 to vector<1x512xi1>
    %11 = vector.broadcast %10 : vector<1x512xi1> to vector<1x512xi1>
    %12 = arith.xori %8, %11 : vector<1x512xi1>
    %13 = arith.andi %12, %6 : vector<1x512xi1>
    %14 = vector.broadcast %2 : i32 to vector<1x512xi32>
    %15 = arith.addi %4, %14 : vector<1x512xi32>
    %16 = arith.select %13, %15, %4 : vector<1x512xi1>, vector<1x512xi32>
    %c2_i32 = arith.constant 2 : i32
    %c0_i32_3 = arith.constant 0 : i32
    %17 = arith.cmpi eq, %c2_i32, %c0_i32_3 : i32
    %c1_i32_4 = arith.constant 1 : i32
    %18 = arith.select %17, %c1_i32_4, %c2_i32 : i32
    %19 = vector.broadcast %18 : i32 to vector<1x512xi32>
    %20 = arith.remsi %0, %19 : vector<1x512xi32>
    %c0_i32_5 = arith.constant 0 : i32
    %21 = vector.broadcast %c0_i32_5 : i32 to vector<1x512xi32>
    %22 = arith.cmpi ne, %20, %21 : vector<1x512xi32>
    %c0_i32_6 = arith.constant 0 : i32
    %23 = vector.broadcast %c0_i32_6 : i32 to vector<1x512xi32>
    %24 = arith.cmpi slt, %20, %23 : vector<1x512xi32>
    %c0_i32_7 = arith.constant 0 : i32
    %25 = arith.cmpi slt, %18, %c0_i32_7 : i32
    %26 = vector.broadcast %25 : i1 to vector<1x512xi1>
    %27 = vector.broadcast %26 : vector<1x512xi1> to vector<1x512xi1>
    %28 = arith.xori %24, %27 : vector<1x512xi1>
    %29 = arith.andi %28, %22 : vector<1x512xi1>
    %30 = vector.broadcast %18 : i32 to vector<1x512xi32>
    %31 = arith.addi %20, %30 : vector<1x512xi32>
    %32 = arith.select %29, %31, %20 : vector<1x512xi1>, vector<1x512xi32>
    %c0_i32_8 = arith.constant 0 : i32
    %33 = vector.broadcast %c0_i32_8 : i32 to vector<1x512xi32>
    %34 = arith.cmpi eq, %32, %33 : vector<1x512xi32>
    %c1_i32_9 = arith.constant 1 : i32
    %35 = vector.broadcast %c1_i32_9 : i32 to vector<1x512xi32>
    %36 = arith.cmpi sge, %16, %35 : vector<1x512xi32>
    %c255_i32 = arith.constant 255 : i32
    %37 = vector.broadcast %c255_i32 : i32 to vector<1x512xi32>
    %38 = arith.cmpi slt, %16, %37 : vector<1x512xi32>
    %c2_i32_10 = arith.constant 2 : i32
    %39 = vector.broadcast %c2_i32_10 : i32 to vector<1x512xi32>
    %40 = arith.cmpi sge, %16, %39 : vector<1x512xi32>
    %c254_i32 = arith.constant 254 : i32
    %41 = vector.broadcast %c254_i32 : i32 to vector<1x512xi32>
    %42 = arith.cmpi slt, %16, %41 : vector<1x512xi32>
    %c0 = arith.constant 0 : index
    %c0_11 = arith.constant 0 : index
    %43 = vector.load %arg9[%c0, %c0_11] : memref<8x12xf32, #tpu.memory_space<vmem>>, vector<8x12xf32>
    %c0_12 = arith.constant 0 : index
    %c0_13 = arith.constant 0 : index
    %44 = vector.load %arg0[%c0_12, %c0_13] : memref<16x512xf32, #tpu.memory_space<vmem>>, vector<16x512xf32>
    %c1_i32_14 = arith.constant 1 : i32
    %45 = tpu.dynamic_rotate %44 by %c1_i32_14 dim 1 : vector<16x512xf32>, i32 -> vector<16x512xf32>
    %cst = arith.constant 0.000000e+00 : f32
    %46 = vector.shape_cast %36 : vector<1x512xi1> to vector<1x512xi1>
    %47 = vector.broadcast %46 : vector<1x512xi1> to vector<16x512xi1>
    %48 = vector.broadcast %cst : f32 to vector<16x512xf32>
    %49 = arith.select %47, %45, %48 : vector<16x512xi1>, vector<16x512xf32>
    %c511_i32 = arith.constant 511 : i32
    %50 = tpu.dynamic_rotate %44 by %c511_i32 dim 1 : vector<16x512xf32>, i32 -> vector<16x512xf32>
    %cst_15 = arith.constant 0.000000e+00 : f32
    %51 = vector.shape_cast %38 : vector<1x512xi1> to vector<1x512xi1>
    %52 = vector.broadcast %51 : vector<1x512xi1> to vector<16x512xi1>
    %53 = vector.broadcast %cst_15 : f32 to vector<16x512xf32>
    %54 = arith.select %52, %50, %53 : vector<16x512xi1>, vector<16x512xf32>
    %55 = tpu.concatenate %49, %44, %54 in 0 : vector<16x512xf32>, vector<16x512xf32>, vector<16x512xf32> -> vector<48x512xf32>
    %c0_16 = arith.constant 0 : index
    %c0_17 = arith.constant 0 : index
    %56 = vector.load %arg2[%c0_16, %c0_17] : memref<16x48xf32, #tpu.memory_space<vmem>>, vector<16x48xf32>
    %cst_18 = arith.constant dense<0.000000e+00> : vector<16x512xf32>
    %57 = tpu.matmul %56, %55, %cst_18 {dimension_numbers = #tpu.dot_dimension_numbers<[1], [0], [0], [1], [0, 0, 1, 1], [], []>} : vector<16x48xf32>, vector<48x512xf32>, vector<16x512xf32> -> vector<16x512xf32>
    %58 = vector.extract_strided_slice %57 {offsets = [0, 0], sizes = [8, 512], strides = [1, 1]} : vector<16x512xf32> to vector<8x512xf32>
    %59 = vector.extract_strided_slice %43 {offsets = [0, 1], sizes = [8, 1], strides = [1, 1]} : vector<8x12xf32> to vector<8x1xf32>
    %60 = vector.broadcast %59 : vector<8x1xf32> to vector<8x512xf32>
    %61 = arith.addf %58, %60 : vector<8x512xf32>
    %cst_19 = arith.constant 0.000000e+00 : f32
    %62 = vector.broadcast %cst_19 : f32 to vector<8x512xf32>
    %63 = arith.cmpf ogt, %61, %62 : vector<8x512xf32>
    %cst_20 = arith.constant 2.000000e-01 : f32
    %64 = vector.broadcast %cst_20 : f32 to vector<8x512xf32>
    %65 = arith.mulf %64, %61 : vector<8x512xf32>
    %66 = arith.select %63, %61, %65 : vector<8x512xi1>, vector<8x512xf32>
    %67 = vector.extract_strided_slice %57 {offsets = [8, 0], sizes = [8, 512], strides = [1, 1]} : vector<16x512xf32> to vector<8x512xf32>
    %68 = vector.extract_strided_slice %43 {offsets = [0, 0], sizes = [8, 1], strides = [1, 1]} : vector<8x12xf32> to vector<8x1xf32>
    %69 = vector.broadcast %68 : vector<8x1xf32> to vector<8x512xf32>
    %70 = arith.addf %67, %69 : vector<8x512xf32>
    %c1_i32_21 = arith.constant 1 : i32
    %71 = tpu.dynamic_rotate %66 by %c1_i32_21 dim 1 : vector<8x512xf32>, i32 -> vector<8x512xf32>
    %cst_22 = arith.constant 0.000000e+00 : f32
    %72 = vector.shape_cast %36 : vector<1x512xi1> to vector<1x512xi1>
    %73 = vector.broadcast %72 : vector<1x512xi1> to vector<8x512xi1>
    %74 = vector.broadcast %cst_22 : f32 to vector<8x512xf32>
    %75 = arith.select %73, %71, %74 : vector<8x512xi1>, vector<8x512xf32>
    %c511_i32_23 = arith.constant 511 : i32
    %76 = tpu.dynamic_rotate %66 by %c511_i32_23 dim 1 : vector<8x512xf32>, i32 -> vector<8x512xf32>
    %cst_24 = arith.constant 0.000000e+00 : f32
    %77 = vector.shape_cast %38 : vector<1x512xi1> to vector<1x512xi1>
    %78 = vector.broadcast %77 : vector<1x512xi1> to vector<8x512xi1>
    %79 = vector.broadcast %cst_24 : f32 to vector<8x512xf32>
    %80 = arith.select %78, %76, %79 : vector<8x512xi1>, vector<8x512xf32>
    %81 = tpu.concatenate %75, %66, %80 in 0 : vector<8x512xf32>, vector<8x512xf32>, vector<8x512xf32> -> vector<24x512xf32>
    %c0_25 = arith.constant 0 : index
    %c0_26 = arith.constant 0 : index
    %82 = vector.load %arg4[%c0_25, %c0_26] : memref<8x24xf32, #tpu.memory_space<vmem>>, vector<8x24xf32>
    %cst_27 = arith.constant dense<0.000000e+00> : vector<8x512xf32>
    %83 = tpu.matmul %82, %81, %cst_27 {dimension_numbers = #tpu.dot_dimension_numbers<[1], [0], [0], [1], [0, 0, 1, 1], [], []>} : vector<8x24xf32>, vector<24x512xf32>, vector<8x512xf32> -> vector<8x512xf32>
    %84 = vector.extract_strided_slice %43 {offsets = [0, 2], sizes = [8, 1], strides = [1, 1]} : vector<8x12xf32> to vector<8x1xf32>
    %85 = vector.broadcast %84 : vector<8x1xf32> to vector<8x512xf32>
    %86 = arith.addf %83, %85 : vector<8x512xf32>
    %cst_28 = arith.constant 0.000000e+00 : f32
    %87 = vector.broadcast %cst_28 : f32 to vector<8x512xf32>
    %88 = arith.cmpf ogt, %86, %87 : vector<8x512xf32>
    %cst_29 = arith.constant 2.000000e-01 : f32
    %89 = vector.broadcast %cst_29 : f32 to vector<8x512xf32>
    %90 = arith.mulf %89, %86 : vector<8x512xf32>
    %91 = arith.select %88, %86, %90 : vector<8x512xi1>, vector<8x512xf32>
    %92 = arith.addf %91, %70 : vector<8x512xf32>
    %c511_i32_30 = arith.constant 511 : i32
    %93 = tpu.dynamic_rotate %92 by %c511_i32_30 dim 1 : vector<8x512xf32>, i32 -> vector<8x512xf32>
    %94 = arith.maximumf %92, %93 : vector<8x512xf32>
    %c2_i32_31 = arith.constant 2 : i32
    %95 = tpu.dynamic_rotate %94 by %c2_i32_31 dim 1 : vector<8x512xf32>, i32 -> vector<8x512xf32>
    %cst_32 = arith.constant 0.000000e+00 : f32
    %96 = vector.shape_cast %40 : vector<1x512xi1> to vector<1x512xi1>
    %97 = vector.broadcast %96 : vector<1x512xi1> to vector<8x512xi1>
    %98 = vector.broadcast %cst_32 : f32 to vector<8x512xf32>
    %99 = arith.select %97, %95, %98 : vector<8x512xi1>, vector<8x512xf32>
    %c510_i32 = arith.constant 510 : i32
    %100 = tpu.dynamic_rotate %94 by %c510_i32 dim 1 : vector<8x512xf32>, i32 -> vector<8x512xf32>
    %cst_33 = arith.constant 0.000000e+00 : f32
    %101 = vector.shape_cast %42 : vector<1x512xi1> to vector<1x512xi1>
    %102 = vector.broadcast %101 : vector<1x512xi1> to vector<8x512xi1>
    %103 = vector.broadcast %cst_33 : f32 to vector<8x512xf32>
    %104 = arith.select %102, %100, %103 : vector<8x512xi1>, vector<8x512xf32>
    %105 = tpu.concatenate %99, %94, %104 in 0 : vector<8x512xf32>, vector<8x512xf32>, vector<8x512xf32> -> vector<24x512xf32>
    %c0_34 = arith.constant 0 : index
    %c0_35 = arith.constant 0 : index
    %106 = vector.load %arg5[%c0_34, %c0_35] : memref<8x24xf32, #tpu.memory_space<vmem>>, vector<8x24xf32>
    %cst_36 = arith.constant dense<0.000000e+00> : vector<8x512xf32>
    %107 = tpu.matmul %106, %105, %cst_36 {dimension_numbers = #tpu.dot_dimension_numbers<[1], [0], [0], [1], [0, 0, 1, 1], [], []>} : vector<8x24xf32>, vector<24x512xf32>, vector<8x512xf32> -> vector<8x512xf32>
    %108 = vector.extract_strided_slice %43 {offsets = [0, 4], sizes = [8, 1], strides = [1, 1]} : vector<8x12xf32> to vector<8x1xf32>
    %109 = vector.extract_strided_slice %43 {offsets = [0, 5], sizes = [8, 1], strides = [1, 1]} : vector<8x12xf32> to vector<8x1xf32>
    %cst_37 = arith.constant 0.000000e+00 : f32
    %110 = vector.shape_cast %34 : vector<1x512xi1> to vector<1x512xi1>
    %111 = vector.broadcast %110 : vector<1x512xi1> to vector<8x512xi1>
    %112 = vector.broadcast %cst_37 : f32 to vector<8x512xf32>
    %113 = arith.select %111, %107, %112 : vector<8x512xi1>, vector<8x512xf32>
    %cst_38 = arith.constant dense<0.000000e+00> : vector<8xf32>
    %114 = vector.multi_reduction <add>, %113, %cst_38 [1] : vector<8x512xf32> to vector<8xf32>
    %115 = vector.shape_cast %114 : vector<8xf32> to vector<8x1xf32>
    %116 = arith.mulf %113, %113 : vector<8x512xf32>
    %cst_39 = arith.constant dense<0.000000e+00> : vector<8xf32>
    %117 = vector.multi_reduction <add>, %116, %cst_39 [1] : vector<8x512xf32> to vector<8xf32>
    %118 = vector.shape_cast %117 : vector<8xf32> to vector<8x1xf32>
    %cst_40 = arith.constant 3.906250e-03 : f32
    %119 = vector.broadcast %cst_40 : f32 to vector<8x1xf32>
    %120 = arith.mulf %115, %119 : vector<8x1xf32>
    %cst_41 = arith.constant 3.906250e-03 : f32
    %121 = vector.broadcast %cst_41 : f32 to vector<8x1xf32>
    %122 = arith.mulf %118, %121 : vector<8x1xf32>
    %123 = arith.mulf %120, %120 : vector<8x1xf32>
    %124 = arith.subf %122, %123 : vector<8x1xf32>
    %cst_42 = arith.constant 0.000000e+00 : f32
    %125 = vector.broadcast %cst_42 : f32 to vector<8x1xf32>
    %126 = arith.maximumf %124, %125 : vector<8x1xf32>
    %cst_43 = arith.constant 9.99999974E-6 : f32
    %127 = vector.broadcast %cst_43 : f32 to vector<8x1xf32>
    %128 = arith.addf %126, %127 : vector<8x1xf32>
    %129 = math.rsqrt %128 : vector<8x1xf32>
    %130 = arith.mulf %108, %129 : vector<8x1xf32>
    %131 = arith.mulf %120, %130 : vector<8x1xf32>
    %132 = arith.subf %109, %131 : vector<8x1xf32>
    %133 = vector.broadcast %130 : vector<8x1xf32> to vector<8x512xf32>
    %134 = arith.mulf %107, %133 : vector<8x512xf32>
    %135 = vector.broadcast %132 : vector<8x1xf32> to vector<8x512xf32>
    %136 = arith.addf %134, %135 : vector<8x512xf32>
    %cst_44 = arith.constant 0.000000e+00 : f32
    %137 = vector.broadcast %cst_44 : f32 to vector<8x512xf32>
    %138 = arith.cmpf ogt, %136, %137 : vector<8x512xf32>
    %cst_45 = arith.constant 2.000000e-01 : f32
    %139 = vector.broadcast %cst_45 : f32 to vector<8x512xf32>
    %140 = arith.mulf %139, %136 : vector<8x512xf32>
    %141 = arith.select %138, %136, %140 : vector<8x512xi1>, vector<8x512xf32>
    %c2_i32_46 = arith.constant 2 : i32
    %142 = tpu.dynamic_rotate %141 by %c2_i32_46 dim 1 : vector<8x512xf32>, i32 -> vector<8x512xf32>
    %cst_47 = arith.constant 0.000000e+00 : f32
    %143 = vector.shape_cast %40 : vector<1x512xi1> to vector<1x512xi1>
    %144 = vector.broadcast %143 : vector<1x512xi1> to vector<8x512xi1>
    %145 = vector.broadcast %cst_47 : f32 to vector<8x512xf32>
    %146 = arith.select %144, %142, %145 : vector<8x512xi1>, vector<8x512xf32>
    %c510_i32_48 = arith.constant 510 : i32
    %147 = tpu.dynamic_rotate %141 by %c510_i32_48 dim 1 : vector<8x512xf32>, i32 -> vector<8x512xf32>
    %cst_49 = arith.constant 0.000000e+00 : f32
    %148 = vector.shape_cast %42 : vector<1x512xi1> to vector<1x512xi1>
    %149 = vector.broadcast %148 : vector<1x512xi1> to vector<8x512xi1>
    %150 = vector.broadcast %cst_49 : f32 to vector<8x512xf32>
    %151 = arith.select %149, %147, %150 : vector<8x512xi1>, vector<8x512xf32>
    %152 = tpu.concatenate %146, %141, %151 in 0 : vector<8x512xf32>, vector<8x512xf32>, vector<8x512xf32> -> vector<24x512xf32>
    %c0_50 = arith.constant 0 : index
    %c0_51 = arith.constant 0 : index
    %153 = vector.load %arg6[%c0_50, %c0_51] : memref<8x24xf32, #tpu.memory_space<vmem>>, vector<8x24xf32>
    %cst_52 = arith.constant dense<0.000000e+00> : vector<8x512xf32>
    %154 = tpu.matmul %153, %152, %cst_52 {dimension_numbers = #tpu.dot_dimension_numbers<[1], [0], [0], [1], [0, 0, 1, 1], [], []>} : vector<8x24xf32>, vector<24x512xf32>, vector<8x512xf32> -> vector<8x512xf32>
    %155 = vector.extract_strided_slice %43 {offsets = [0, 6], sizes = [8, 1], strides = [1, 1]} : vector<8x12xf32> to vector<8x1xf32>
    %156 = vector.extract_strided_slice %43 {offsets = [0, 7], sizes = [8, 1], strides = [1, 1]} : vector<8x12xf32> to vector<8x1xf32>
    %cst_53 = arith.constant 0.000000e+00 : f32
    %157 = vector.shape_cast %34 : vector<1x512xi1> to vector<1x512xi1>
    %158 = vector.broadcast %157 : vector<1x512xi1> to vector<8x512xi1>
    %159 = vector.broadcast %cst_53 : f32 to vector<8x512xf32>
    %160 = arith.select %158, %154, %159 : vector<8x512xi1>, vector<8x512xf32>
    %cst_54 = arith.constant dense<0.000000e+00> : vector<8xf32>
    %161 = vector.multi_reduction <add>, %160, %cst_54 [1] : vector<8x512xf32> to vector<8xf32>
    %162 = vector.shape_cast %161 : vector<8xf32> to vector<8x1xf32>
    %163 = arith.mulf %160, %160 : vector<8x512xf32>
    %cst_55 = arith.constant dense<0.000000e+00> : vector<8xf32>
    %164 = vector.multi_reduction <add>, %163, %cst_55 [1] : vector<8x512xf32> to vector<8xf32>
    %165 = vector.shape_cast %164 : vector<8xf32> to vector<8x1xf32>
    %cst_56 = arith.constant 3.906250e-03 : f32
    %166 = vector.broadcast %cst_56 : f32 to vector<8x1xf32>
    %167 = arith.mulf %162, %166 : vector<8x1xf32>
    %cst_57 = arith.constant 3.906250e-03 : f32
    %168 = vector.broadcast %cst_57 : f32 to vector<8x1xf32>
    %169 = arith.mulf %165, %168 : vector<8x1xf32>
    %170 = arith.mulf %167, %167 : vector<8x1xf32>
    %171 = arith.subf %169, %170 : vector<8x1xf32>
    %cst_58 = arith.constant 0.000000e+00 : f32
    %172 = vector.broadcast %cst_58 : f32 to vector<8x1xf32>
    %173 = arith.maximumf %171, %172 : vector<8x1xf32>
    %cst_59 = arith.constant 9.99999974E-6 : f32
    %174 = vector.broadcast %cst_59 : f32 to vector<8x1xf32>
    %175 = arith.addf %173, %174 : vector<8x1xf32>
    %176 = math.rsqrt %175 : vector<8x1xf32>
    %177 = arith.mulf %155, %176 : vector<8x1xf32>
    %178 = arith.mulf %167, %177 : vector<8x1xf32>
    %179 = arith.subf %156, %178 : vector<8x1xf32>
    %180 = vector.broadcast %177 : vector<8x1xf32> to vector<8x512xf32>
    %181 = arith.mulf %154, %180 : vector<8x512xf32>
    %182 = vector.broadcast %179 : vector<8x1xf32> to vector<8x512xf32>
    %183 = arith.addf %181, %182 : vector<8x512xf32>
    %cst_60 = arith.constant 0.000000e+00 : f32
    %184 = vector.broadcast %cst_60 : f32 to vector<8x512xf32>
    %185 = arith.cmpf ogt, %183, %184 : vector<8x512xf32>
    %cst_61 = arith.constant 2.000000e-01 : f32
    %186 = vector.broadcast %cst_61 : f32 to vector<8x512xf32>
    %187 = arith.mulf %186, %183 : vector<8x512xf32>
    %188 = arith.select %185, %183, %187 : vector<8x512xi1>, vector<8x512xf32>
    %c0_62 = arith.constant 0 : index
    %c0_63 = arith.constant 0 : index
    %189 = vector.load %arg1[%c0_62, %c0_63] : memref<8x512xf32, #tpu.memory_space<vmem>>, vector<8x512xf32>
    %c0_64 = arith.constant 0 : index
    %c0_65 = arith.constant 0 : index
    %190 = vector.load %arg3[%c0_64, %c0_65] : memref<8x8xf32, #tpu.memory_space<vmem>>, vector<8x8xf32>
    %cst_66 = arith.constant dense<0.000000e+00> : vector<8x512xf32>
    %191 = tpu.matmul %190, %189, %cst_66 {dimension_numbers = #tpu.dot_dimension_numbers<[1], [0], [0], [1], [0, 0, 1, 1], [], []>} : vector<8x8xf32>, vector<8x512xf32>, vector<8x512xf32> -> vector<8x512xf32>
    %192 = arith.addf %188, %191 : vector<8x512xf32>
    %193 = vector.extract_strided_slice %43 {offsets = [0, 3], sizes = [8, 1], strides = [1, 1]} : vector<8x12xf32> to vector<8x1xf32>
    %194 = vector.broadcast %193 : vector<8x1xf32> to vector<8x512xf32>
    %195 = arith.addf %192, %194 : vector<8x512xf32>
    %c1_i32_67 = arith.constant 1 : i32
    %196 = tpu.dynamic_rotate %195 by %c1_i32_67 dim 1 : vector<8x512xf32>, i32 -> vector<8x512xf32>
    %197 = vector.shape_cast %34 : vector<1x512xi1> to vector<1x512xi1>
    %198 = vector.broadcast %197 : vector<1x512xi1> to vector<8x512xi1>
    %199 = arith.select %198, %195, %196 : vector<8x512xi1>, vector<8x512xf32>
    %c1_i32_68 = arith.constant 1 : i32
    %200 = tpu.dynamic_rotate %92 by %c1_i32_68 dim 1 : vector<8x512xf32>, i32 -> vector<8x512xf32>
    %cst_69 = arith.constant 0.000000e+00 : f32
    %201 = vector.shape_cast %36 : vector<1x512xi1> to vector<1x512xi1>
    %202 = vector.broadcast %201 : vector<1x512xi1> to vector<8x512xi1>
    %203 = vector.broadcast %cst_69 : f32 to vector<8x512xf32>
    %204 = arith.select %202, %200, %203 : vector<8x512xi1>, vector<8x512xf32>
    %c1_i32_70 = arith.constant 1 : i32
    %205 = tpu.dynamic_rotate %199 by %c1_i32_70 dim 1 : vector<8x512xf32>, i32 -> vector<8x512xf32>
    %cst_71 = arith.constant 0.000000e+00 : f32
    %206 = vector.shape_cast %36 : vector<1x512xi1> to vector<1x512xi1>
    %207 = vector.broadcast %206 : vector<1x512xi1> to vector<8x512xi1>
    %208 = vector.broadcast %cst_71 : f32 to vector<8x512xf32>
    %209 = arith.select %207, %205, %208 : vector<8x512xi1>, vector<8x512xf32>
    %c511_i32_72 = arith.constant 511 : i32
    %210 = tpu.dynamic_rotate %92 by %c511_i32_72 dim 1 : vector<8x512xf32>, i32 -> vector<8x512xf32>
    %cst_73 = arith.constant 0.000000e+00 : f32
    %211 = vector.shape_cast %38 : vector<1x512xi1> to vector<1x512xi1>
    %212 = vector.broadcast %211 : vector<1x512xi1> to vector<8x512xi1>
    %213 = vector.broadcast %cst_73 : f32 to vector<8x512xf32>
    %214 = arith.select %212, %210, %213 : vector<8x512xi1>, vector<8x512xf32>
    %c511_i32_74 = arith.constant 511 : i32
    %215 = tpu.dynamic_rotate %199 by %c511_i32_74 dim 1 : vector<8x512xf32>, i32 -> vector<8x512xf32>
    %cst_75 = arith.constant 0.000000e+00 : f32
    %216 = vector.shape_cast %38 : vector<1x512xi1> to vector<1x512xi1>
    %217 = vector.broadcast %216 : vector<1x512xi1> to vector<8x512xi1>
    %218 = vector.broadcast %cst_75 : f32 to vector<8x512xf32>
    %219 = arith.select %217, %215, %218 : vector<8x512xi1>, vector<8x512xf32>
    %220 = tpu.concatenate %204, %209, %92, %199, %214, %219 in 0 : vector<8x512xf32>, vector<8x512xf32>, vector<8x512xf32>, vector<8x512xf32>, vector<8x512xf32>, vector<8x512xf32> -> vector<48x512xf32>
    %c0_76 = arith.constant 0 : index
    %c0_77 = arith.constant 0 : index
    %221 = vector.load %arg7[%c0_76, %c0_77] : memref<8x48xf32, #tpu.memory_space<vmem>>, vector<8x48xf32>
    %cst_78 = arith.constant dense<0.000000e+00> : vector<8x512xf32>
    %222 = tpu.matmul %221, %220, %cst_78 {dimension_numbers = #tpu.dot_dimension_numbers<[1], [0], [0], [1], [0, 0, 1, 1], [], []>} : vector<8x48xf32>, vector<48x512xf32>, vector<8x512xf32> -> vector<8x512xf32>
    %223 = vector.extract_strided_slice %43 {offsets = [0, 8], sizes = [8, 1], strides = [1, 1]} : vector<8x12xf32> to vector<8x1xf32>
    %224 = vector.extract_strided_slice %43 {offsets = [0, 9], sizes = [8, 1], strides = [1, 1]} : vector<8x12xf32> to vector<8x1xf32>
    %cst_79 = arith.constant dense<0.000000e+00> : vector<8xf32>
    %225 = vector.multi_reduction <add>, %222, %cst_79 [1] : vector<8x512xf32> to vector<8xf32>
    %226 = vector.shape_cast %225 : vector<8xf32> to vector<8x1xf32>
    %227 = arith.mulf %222, %222 : vector<8x512xf32>
    %cst_80 = arith.constant dense<0.000000e+00> : vector<8xf32>
    %228 = vector.multi_reduction <add>, %227, %cst_80 [1] : vector<8x512xf32> to vector<8xf32>
    %229 = vector.shape_cast %228 : vector<8xf32> to vector<8x1xf32>
    %cst_81 = arith.constant 0.001953125 : f32
    %230 = vector.broadcast %cst_81 : f32 to vector<8x1xf32>
    %231 = arith.mulf %226, %230 : vector<8x1xf32>
    %cst_82 = arith.constant 0.001953125 : f32
    %232 = vector.broadcast %cst_82 : f32 to vector<8x1xf32>
    %233 = arith.mulf %229, %232 : vector<8x1xf32>
    %234 = arith.mulf %231, %231 : vector<8x1xf32>
    %235 = arith.subf %233, %234 : vector<8x1xf32>
    %cst_83 = arith.constant 0.000000e+00 : f32
    %236 = vector.broadcast %cst_83 : f32 to vector<8x1xf32>
    %237 = arith.maximumf %235, %236 : vector<8x1xf32>
    %cst_84 = arith.constant 9.99999974E-6 : f32
    %238 = vector.broadcast %cst_84 : f32 to vector<8x1xf32>
    %239 = arith.addf %237, %238 : vector<8x1xf32>
    %240 = math.rsqrt %239 : vector<8x1xf32>
    %241 = arith.mulf %223, %240 : vector<8x1xf32>
    %242 = arith.mulf %231, %241 : vector<8x1xf32>
    %243 = arith.subf %224, %242 : vector<8x1xf32>
    %244 = vector.broadcast %241 : vector<8x1xf32> to vector<8x512xf32>
    %245 = arith.mulf %222, %244 : vector<8x512xf32>
    %246 = vector.broadcast %243 : vector<8x1xf32> to vector<8x512xf32>
    %247 = arith.addf %245, %246 : vector<8x512xf32>
    %cst_85 = arith.constant 0.000000e+00 : f32
    %248 = vector.broadcast %cst_85 : f32 to vector<8x512xf32>
    %249 = arith.cmpf ogt, %247, %248 : vector<8x512xf32>
    %cst_86 = arith.constant 2.000000e-01 : f32
    %250 = vector.broadcast %cst_86 : f32 to vector<8x512xf32>
    %251 = arith.mulf %250, %247 : vector<8x512xf32>
    %252 = arith.select %249, %247, %251 : vector<8x512xi1>, vector<8x512xf32>
    %c1_i32_87 = arith.constant 1 : i32
    %253 = tpu.dynamic_rotate %252 by %c1_i32_87 dim 1 : vector<8x512xf32>, i32 -> vector<8x512xf32>
    %cst_88 = arith.constant 0.000000e+00 : f32
    %254 = vector.shape_cast %36 : vector<1x512xi1> to vector<1x512xi1>
    %255 = vector.broadcast %254 : vector<1x512xi1> to vector<8x512xi1>
    %256 = vector.broadcast %cst_88 : f32 to vector<8x512xf32>
    %257 = arith.select %255, %253, %256 : vector<8x512xi1>, vector<8x512xf32>
    %c511_i32_89 = arith.constant 511 : i32
    %258 = tpu.dynamic_rotate %252 by %c511_i32_89 dim 1 : vector<8x512xf32>, i32 -> vector<8x512xf32>
    %cst_90 = arith.constant 0.000000e+00 : f32
    %259 = vector.shape_cast %38 : vector<1x512xi1> to vector<1x512xi1>
    %260 = vector.broadcast %259 : vector<1x512xi1> to vector<8x512xi1>
    %261 = vector.broadcast %cst_90 : f32 to vector<8x512xf32>
    %262 = arith.select %260, %258, %261 : vector<8x512xi1>, vector<8x512xf32>
    %263 = tpu.concatenate %257, %252, %262 in 0 : vector<8x512xf32>, vector<8x512xf32>, vector<8x512xf32> -> vector<24x512xf32>
    %c0_91 = arith.constant 0 : index
    %c0_92 = arith.constant 0 : index
    %264 = vector.load %arg8[%c0_91, %c0_92] : memref<8x24xf32, #tpu.memory_space<vmem>>, vector<8x24xf32>
    %cst_93 = arith.constant dense<0.000000e+00> : vector<8x512xf32>
    %265 = tpu.matmul %264, %263, %cst_93 {dimension_numbers = #tpu.dot_dimension_numbers<[1], [0], [0], [1], [0, 0, 1, 1], [], []>} : vector<8x24xf32>, vector<24x512xf32>, vector<8x512xf32> -> vector<8x512xf32>
    %266 = vector.extract_strided_slice %43 {offsets = [0, 10], sizes = [8, 1], strides = [1, 1]} : vector<8x12xf32> to vector<8x1xf32>
    %267 = vector.extract_strided_slice %43 {offsets = [0, 11], sizes = [8, 1], strides = [1, 1]} : vector<8x12xf32> to vector<8x1xf32>
    %cst_94 = arith.constant dense<0.000000e+00> : vector<8xf32>
    %268 = vector.multi_reduction <add>, %265, %cst_94 [1] : vector<8x512xf32> to vector<8xf32>
    %269 = vector.shape_cast %268 : vector<8xf32> to vector<8x1xf32>
    %270 = arith.mulf %265, %265 : vector<8x512xf32>
    %cst_95 = arith.constant dense<0.000000e+00> : vector<8xf32>
    %271 = vector.multi_reduction <add>, %270, %cst_95 [1] : vector<8x512xf32> to vector<8xf32>
    %272 = vector.shape_cast %271 : vector<8xf32> to vector<8x1xf32>
    %cst_96 = arith.constant 0.001953125 : f32
    %273 = vector.broadcast %cst_96 : f32 to vector<8x1xf32>
    %274 = arith.mulf %269, %273 : vector<8x1xf32>
    %cst_97 = arith.constant 0.001953125 : f32
    %275 = vector.broadcast %cst_97 : f32 to vector<8x1xf32>
    %276 = arith.mulf %272, %275 : vector<8x1xf32>
    %277 = arith.mulf %274, %274 : vector<8x1xf32>
    %278 = arith.subf %276, %277 : vector<8x1xf32>
    %cst_98 = arith.constant 0.000000e+00 : f32
    %279 = vector.broadcast %cst_98 : f32 to vector<8x1xf32>
    %280 = arith.maximumf %278, %279 : vector<8x1xf32>
    %cst_99 = arith.constant 9.99999974E-6 : f32
    %281 = vector.broadcast %cst_99 : f32 to vector<8x1xf32>
    %282 = arith.addf %280, %281 : vector<8x1xf32>
    %283 = math.rsqrt %282 : vector<8x1xf32>
    %284 = arith.mulf %266, %283 : vector<8x1xf32>
    %285 = arith.mulf %274, %284 : vector<8x1xf32>
    %286 = arith.subf %267, %285 : vector<8x1xf32>
    %287 = vector.broadcast %284 : vector<8x1xf32> to vector<8x512xf32>
    %288 = arith.mulf %265, %287 : vector<8x512xf32>
    %289 = vector.broadcast %286 : vector<8x1xf32> to vector<8x512xf32>
    %290 = arith.addf %288, %289 : vector<8x512xf32>
    %cst_100 = arith.constant 0.000000e+00 : f32
    %291 = vector.broadcast %cst_100 : f32 to vector<8x512xf32>
    %292 = arith.cmpf ogt, %290, %291 : vector<8x512xf32>
    %cst_101 = arith.constant 2.000000e-01 : f32
    %293 = vector.broadcast %cst_101 : f32 to vector<8x512xf32>
    %294 = arith.mulf %293, %290 : vector<8x512xf32>
    %295 = arith.select %292, %290, %294 : vector<8x512xi1>, vector<8x512xf32>
    %c0_102 = arith.constant 0 : index
    %c0_103 = arith.constant 0 : index
    %296 = vector.load %arg10[%c0_102, %c0_103] : memref<8x512xf32, #tpu.memory_space<vmem>>, vector<8x512xf32>
    tpu.vector_store %arg10[%c0_102, %c0_103], %295 {strides = array<i32>} : memref<8x512xf32, #tpu.memory_space<vmem>>, vector<8x512xf32>,
    return
  }
}

</mosaic_0001>

<llo_original>
// kernel: trunc_residual_block_forward.1
$region0: #{trunc_residual_block_forward.1}
  #allocation0 [shape = 'u32[]', space=smem, size = 0x4, offset = 0x4, fixed_abs, tag = 'smem constant byte address 0x4 - core index']
  #allocation1 [shape = 'u32[144,128]{1,0:T(1,128)}', space=vmem, size = 0x12000, scoped, tag = 'internal scratch']
  %s0 = inlined_call_operand.vmem [shape: f32[16,512], index: 0, kind: input, shape index: {}]
  %s1 = inlined_call_operand.vmem [shape: f32[8,512], index: 1, kind: input, shape index: {}]
  %s2 = inlined_call_operand.vmem [shape: f32[16,48], index: 2, kind: input, shape index: {}]
  %s3 = inlined_call_operand.vmem [shape: f32[8,8], index: 3, kind: input, shape index: {}]
  %s4 = inlined_call_operand.vmem [shape: f32[8,24], index: 4, kind: input, shape index: {}]
  %s5 = inlined_call_operand.vmem [shape: f32[8,24], index: 5, kind: input, shape index: {}]
  %s6 = inlined_call_operand.vmem [shape: f32[8,24], index: 6, kind: input, shape index: {}]
  %s7 = inlined_call_operand.vmem [shape: f32[8,48], index: 7, kind: input, shape index: {}]
  %s8 = inlined_call_operand.vmem [shape: f32[8,24], index: 8, kind: input, shape index: {}]
  %s9 = inlined_call_operand.vmem [shape: f32[8,12], index: 9, kind: input, shape index: {}]
  %s10 = inlined_call_operand.vmem [shape: f32[8,512], index: 10, kind: output, shape index: {}]
  %s11 = sld [smem:[#allocation0]]
  $region50: #{trunc_residual_block_forward.1} parent=0
    _
  %s13 = ssub.s32 1, %s11
  %s14 = scalar_select 0, %s13, %s11
  // Predicated region
  $region2: #{trunc_residual_block_forward.1} parent=0 // pred_check
    _
  $region3: #{trunc_residual_block_forward.1} parent=0 // pred_check_branch
    %16 = sbr.rel (0) target = $region5
  $region4: #{trunc_residual_block_forward.1} parent=0 // pred_region
    _
  $region5: #{trunc_residual_block_forward.1} parent=0 // pred_fallthru
    _
  // Predicated region
  $region6: #{trunc_residual_block_forward.1} parent=0 // pred_check
    _
  $region7: #{trunc_residual_block_forward.1} parent=0 // pred_check_branch
    %18 = sbr.rel (0) target = $region9
  $region8: #{trunc_residual_block_forward.1} parent=0 // pred_region
    _
  $region9: #{trunc_residual_block_forward.1} parent=0 // pred_fallthru
    _
  // Predicated region
  $region10: #{trunc_residual_block_forward.1} parent=0 // pred_check
    _
  $region11: #{trunc_residual_block_forward.1} parent=0 // pred_check_branch
    %20 = sbr.rel (0) target = $region13
  $region12: #{trunc_residual_block_forward.1} parent=0 // pred_region
    _
  $region13: #{trunc_residual_block_forward.1} parent=0 // pred_fallthru
    _
  // Predicated region
  $region14: #{trunc_residual_block_forward.1} parent=0 // pred_check
    _
  $region15: #{trunc_residual_block_forward.1} parent=0 // pred_check_branch
    %22 = sbr.rel (0) target = $region17
  $region16: #{trunc_residual_block_forward.1} parent=0 // pred_region
    _
  $region17: #{trunc_residual_block_forward.1} parent=0 // pred_fallthru
    _
  // Predicated region
  $region18: #{trunc_residual_block_forward.1} parent=0 // pred_check
    _
  $region19: #{trunc_residual_block_forward.1} parent=0 // pred_check_branch
    %24 = sbr.rel (0) target = $region21
  $region20: #{trunc_residual_block_forward.1} parent=0 // pred_region
    _
  $region21: #{trunc_residual_block_forward.1} parent=0 // pred_fallthru
    _
  // Predicated region
  $region22: #{trunc_residual_block_forward.1} parent=0 // pred_check
    _
  $region23: #{trunc_residual_block_forward.1} parent=0 // pred_check_branch
    %26 = sbr.rel (0) target = $region25
  $region24: #{trunc_residual_block_forward.1} parent=0 // pred_region
    _
  $region25: #{trunc_residual_block_forward.1} parent=0 // pred_fallthru
    _
  // Predicated region
  $region26: #{trunc_residual_block_forward.1} parent=0 // pred_check
    _
  $region27: #{trunc_residual_block_forward.1} parent=0 // pred_check_branch
    %28 = sbr.rel (0) target = $region29
  $region28: #{trunc_residual_block_forward.1} parent=0 // pred_region
    _
  $region29: #{trunc_residual_block_forward.1} parent=0 // pred_fallthru
    _
  // Predicated region
  $region30: #{trunc_residual_block_forward.1} parent=0 // pred_check
    _
  $region31: #{trunc_residual_block_forward.1} parent=0 // pred_check_branch
    %30 = sbr.rel (0) target = $region33
  $region32: #{trunc_residual_block_forward.1} parent=0 // pred_region
    _
  $region33: #{trunc_residual_block_forward.1} parent=0 // pred_fallthru
    _
  // Predicated region
  $region34: #{trunc_residual_block_forward.1} parent=0 // pred_check
    _
  $region35: #{trunc_residual_block_forward.1} parent=0 // pred_check_branch
    %32 = sbr.rel (0) target = $region37
  $region36: #{trunc_residual_block_forward.1} parent=0 // pred_region
    _
  $region37: #{trunc_residual_block_forward.1} parent=0 // pred_fallthru
    _
  // Predicated region
  $region38: #{trunc_residual_block_forward.1} parent=0 // pred_check
    _
  $region39: #{trunc_residual_block_forward.1} parent=0 // pred_check_branch
    %34 = sbr.rel (0) target = $region41
  $region40: #{trunc_residual_block_forward.1} parent=0 // pred_region
    _
  $region41: #{trunc_residual_block_forward.1} parent=0 // pred_fallthru
    _
  %v35 = vlaneseq
  %v36 = vand.u32 %v35, 127
  %v37 = vadd.s32 %v36, 128
  %v38 = vadd.s32 %v36, 256
  %v39 = vadd.s32 %v36, 384
  %vm40 = vcmp.lt.s32.totalorder %v36, 0
  %v41 = vsub.s32 0, %v36
  %v42 = vsel %vm40, %v41, %v36
  %v43 = vshrl.u32 %v42, 8
  %v44 = vand.u32 %v42, 255
  %v45 = vsub.s32 0, %v44
  %v46 = vsel %vm40, %v45, %v44
  %vm47 = vcmp.lt.s32.totalorder %v37, 0
  %v48 = vsub.s32 0, %v37
  %v49 = vsel %vm47, %v48, %v37
  %v50 = vshrl.u32 %v49, 8
  %v51 = vand.u32 %v49, 255
  %v52 = vsub.s32 0, %v51
  %v53 = vsel %vm47, %v52, %v51
  %vm54 = vcmp.lt.s32.totalorder %v38, 0
  %v55 = vsub.s32 0, %v38
  %v56 = vsel %vm54, %v55, %v38
  %v57 = vshrl.u32 %v56, 8
  %v58 = vand.u32 %v56, 255
  %v59 = vsub.s32 0, %v58
  %v60 = vsel %vm54, %v59, %v58
  %vm61 = vcmp.lt.s32.totalorder %v39, 0
  %v62 = vsub.s32 0, %v39
  %v63 = vsel %vm61, %v62, %v39
  %v64 = vshrl.u32 %v63, 8
  %v65 = vand.u32 %v63, 255
  %v66 = vsub.s32 0, %v65
  %v67 = vsel %vm61, %v66, %v65
  %vm68 = vcmp.ne.s32.totalorder %v46, 0
  %vm69 = vcmp.ne.s32.totalorder %v53, 0
  %vm70 = vcmp.ne.s32.totalorder %v60, 0
  %vm71 = vcmp.ne.s32.totalorder %v67, 0
  %vm72 = vcmp.lt.s32.totalorder %v46, 0
  %vm73 = vcmp.lt.s32.totalorder %v53, 0
  %vm74 = vcmp.lt.s32.totalorder %v60, 0
  %vm75 = vcmp.lt.s32.totalorder %v67, 0
  %vm76 = vmand %vm72, %vm68
  %vm77 = vmand %vm73, %vm69
  %vm78 = vmand %vm74, %vm70
  %vm79 = vmand %vm75, %vm71
  %v80 = vadd.s32 %v46, 256
  %v81 = vadd.s32 %v53, 256
  %v82 = vadd.s32 %v60, 256
  %v83 = vadd.s32 %v67, 256
  %v84 = vsel %vm76, %v80, %v46
  %v85 = vsel %vm77, %v81, %v53
  %v86 = vsel %vm78, %v82, %v60
  %v87 = vsel %vm79, %v83, %v67
  %vm88 = vcmp.lt.s32.totalorder %v36, 0
  %v89 = vsub.s32 0, %v36
  %v90 = vsel %vm88, %v89, %v36
  %v91 = vshrl.u32 %v90, 1
  %v92 = vand.u32 %v90, 1
  %v93 = vsub.s32 0, %v92
  %v94 = vsel %vm88, %v93, %v92
  %vm95 = vcmp.lt.s32.totalorder %v37, 0
  %v96 = vsub.s32 0, %v37
  %v97 = vsel %vm95, %v96, %v37
  %v98 = vshrl.u32 %v97, 1
  %v99 = vand.u32 %v97, 1
  %v100 = vsub.s32 0, %v99
  %v101 = vsel %vm95, %v100, %v99
  %vm102 = vcmp.lt.s32.totalorder %v38, 0
  %v103 = vsub.s32 0, %v38
  %v104 = vsel %vm102, %v103, %v38
  %v105 = vshrl.u32 %v104, 1
  %v106 = vand.u32 %v104, 1
  %v107 = vsub.s32 0, %v106
  %v108 = vsel %vm102, %v107, %v106
  %vm109 = vcmp.lt.s32.totalorder %v39, 0
  %v110 = vsub.s32 0, %v39
  %v111 = vsel %vm109, %v110, %v39
  %v112 = vshrl.u32 %v111, 1
  %v113 = vand.u32 %v111, 1
  %v114 = vsub.s32 0, %v113
  %v115 = vsel %vm109, %v114, %v113
  %vm116 = vcmp.ne.s32.totalorder %v94, 0
  %vm117 = vcmp.ne.s32.totalorder %v101, 0
  %vm118 = vcmp.ne.s32.totalorder %v108, 0
  %vm119 = vcmp.ne.s32.totalorder %v115, 0
  %vm120 = vcmp.lt.s32.totalorder %v94, 0
  %vm121 = vcmp.lt.s32.totalorder %v101, 0
  %vm122 = vcmp.lt.s32.totalorder %v108, 0
  %vm123 = vcmp.lt.s32.totalorder %v115, 0
  %vm124 = vmand %vm120, %vm116
  %vm125 = vmand %vm121, %vm117
  %vm126 = vmand %vm122, %vm118
  %vm127 = vmand %vm123, %vm119
  %v128 = vadd.s32 %v94, 2
  %v129 = vadd.s32 %v101, 2
  %v130 = vadd.s32 %v108, 2
  %v131 = vadd.s32 %v115, 2
  %v132 = vsel %vm124, %v128, %v94
  %v133 = vsel %vm125, %v129, %v101
  %v134 = vsel %vm126, %v130, %v108
  %v135 = vsel %vm127, %v131, %v115
  %vm136 = vcmp.eq.s32.totalorder %v132, 0
  %vm137 = vcmp.eq.s32.totalorder %v133, 0
  %vm138 = vcmp.eq.s32.totalorder %v134, 0
  %vm139 = vcmp.eq.s32.totalorder %v135, 0
  %vm140 = vcmp.ge.s32.totalorder %v84, 1
  %vm141 = vcmp.ge.s32.totalorder %v85, 1
  %vm142 = vcmp.ge.s32.totalorder %v86, 1
  %vm143 = vcmp.ge.s32.totalorder %v87, 1
  %vm144 = vcmp.lt.s32.totalorder %v84, 255
  %vm145 = vcmp.lt.s32.totalorder %v85, 255
  %vm146 = vcmp.lt.s32.totalorder %v86, 255
  %vm147 = vcmp.lt.s32.totalorder %v87, 255
  %vm148 = vcmp.ge.s32.totalorder %v84, 2
  %vm149 = vcmp.ge.s32.totalorder %v85, 2
  %vm150 = vcmp.ge.s32.totalorder %v86, 2
  %vm151 = vcmp.ge.s32.totalorder %v87, 2
  %vm152 = vcmp.lt.s32.totalorder %v84, 254
  %vm153 = vcmp.lt.s32.totalorder %v85, 254
  %vm154 = vcmp.lt.s32.totalorder %v86, 254
  %vm155 = vcmp.lt.s32.totalorder %v87, 254
  %v156 = vld [vmem:[%s9] sm:$0xff]
  %v157 = vld [vmem:[%s0] sm:$0xff]
  %v158 = vld [vmem:[%s0 + $0x8] sm:$0xff]
  %v159 = vld [vmem:[%s0 + $0x10] sm:$0xff]
  %v160 = vld [vmem:[%s0 + $0x18] sm:$0xff]
  %v161 = vld [vmem:[%s0 + $0x20] sm:$0xff]
  %v162 = vld [vmem:[%s0 + $0x28] sm:$0xff]
  %v163 = vld [vmem:[%s0 + $0x30] sm:$0xff]
  %v164 = vld [vmem:[%s0 + $0x38] sm:$0xff]
  %165 = vrot.lane.b32.xlu0 %v157, 1
  %v166 = vpop.permute.xlu0 %165
  %167 = vrot.lane.b32.xlu0 %v161, 1
  %v168 = vpop.permute.xlu0 %167
  %169 = vrot.lane.b32.xlu0 %v158, 1
  %v170 = vpop.permute.xlu0 %169
  %171 = vrot.lane.b32.xlu0 %v162, 1
  %v172 = vpop.permute.xlu0 %171
  %173 = vrot.lane.b32.xlu0 %v159, 1
  %v174 = vpop.permute.xlu0 %173
  %175 = vrot.lane.b32.xlu0 %v163, 1
  %v176 = vpop.permute.xlu0 %175
  %177 = vrot.lane.b32.xlu0 %v160, 1
  %v178 = vpop.permute.xlu0 %177
  %179 = vrot.lane.b32.xlu0 %v164, 1
  %v180 = vpop.permute.xlu0 %179
  %vm181 = vcmp.lt.s32.totalorder %v36, 1
  %v182 = vsel %vm181, %v174, %v178
  %v183 = vsel %vm181, %v176, %v180
  %v184 = vsel %vm181, %v170, %v174
  %v185 = vsel %vm181, %v172, %v176
  %v186 = vsel %vm181, %v166, %v170
  %v187 = vsel %vm181, %v168, %v172
  %v188 = vsel %vm181, %v178, %v166
  %v189 = vsel %vm181, %v180, %v168
  %v190 = vsel %vm140, 1, 0
  %v191 = vsel %vm141, 1, 0
  %v192 = vsel %vm142, 1, 0
  %v193 = vsel %vm143, 1, 0
  %vm194 = vcmp.eq.s32.totalorder %v190, 1
  %vm195 = vcmp.eq.s32.totalorder %v191, 1
  %vm196 = vcmp.eq.s32.totalorder %v192, 1
  %vm197 = vcmp.eq.s32.totalorder %v193, 1
  %v198 = vsel %vm194, %v188, 0.0
  %v199 = vsel %vm195, %v186, 0.0
  %v200 = vsel %vm196, %v184, 0.0
  %v201 = vsel %vm197, %v182, 0.0
  %v202 = vsel %vm194, %v189, 0.0
  %v203 = vsel %vm195, %v187, 0.0
  %v204 = vsel %vm196, %v185, 0.0
  %v205 = vsel %vm197, %v183, 0.0
  %206 = vrot.lane.b32.xlu0 %v157, 127
  %v207 = vpop.permute.xlu0 %206
  %208 = vrot.lane.b32.xlu0 %v161, 127
  %v209 = vpop.permute.xlu0 %208
  %210 = vrot.lane.b32.xlu0 %v158, 127
  %v211 = vpop.permute.xlu0 %210
  %212 = vrot.lane.b32.xlu0 %v162, 127
  %v213 = vpop.permute.xlu0 %212
  %214 = vrot.lane.b32.xlu0 %v159, 127
  %v215 = vpop.permute.xlu0 %214
  %216 = vrot.lane.b32.xlu0 %v163, 127
  %v217 = vpop.permute.xlu0 %216
  %218 = vrot.lane.b32.xlu0 %v160, 127
  %v219 = vpop.permute.xlu0 %218
  %220 = vrot.lane.b32.xlu0 %v164, 127
  %v221 = vpop.permute.xlu0 %220
  %vm222 = vcmp.lt.s32.totalorder %v36, 127
  %v223 = vsel %vm222, %v215, %v219
  %v224 = vsel %vm222, %v217, %v221
  %v225 = vsel %vm222, %v211, %v215
  %v226 = vsel %vm222, %v213, %v217
  %v227 = vsel %vm222, %v207, %v211
  %v228 = vsel %vm222, %v209, %v213
  %v229 = vsel %vm222, %v219, %v207
  %v230 = vsel %vm222, %v221, %v209
  %v231 = vsel %vm144, 1, 0
  %v232 = vsel %vm145, 1, 0
  %v233 = vsel %vm146, 1, 0
  %v234 = vsel %vm147, 1, 0
  %vm235 = vcmp.eq.s32.totalorder %v231, 1
  %vm236 = vcmp.eq.s32.totalorder %v232, 1
  %vm237 = vcmp.eq.s32.totalorder %v233, 1
  %vm238 = vcmp.eq.s32.totalorder %v234, 1
  %v239 = vsel %vm235, %v227, 0.0
  %v240 = vsel %vm236, %v225, 0.0
  %v241 = vsel %vm237, %v223, 0.0
  %v242 = vsel %vm238, %v229, 0.0
  %v243 = vsel %vm235, %v228, 0.0
  %v244 = vsel %vm236, %v226, 0.0
  %v245 = vsel %vm237, %v224, 0.0
  %v246 = vsel %vm238, %v230, 0.0
  %v247 = vld [vmem:[%s2] sm:$0xff]
  %v248 = vld [vmem:[%s2 + $0x8] sm:$0xff]
  %vm249 = vcmask 392192
  %v251 = vsel %vm249, %v247, 0
  %v254 = vsel %vm249, %v248, 0
  %256 = vmatprep.subr.mxu0 %v199
  %257 = vmatpush1.msra.mxu0 %v198
  %258 = vmatprep.subr.mxu0 %v203
  %259 = vmatpush1.msra.mxu0 %v202
  %260 = vmatprep.subr.mxu0 %v158
  %261 = vmatpush1.msra.mxu0 %v157
  %262 = vmatprep.subr.mxu0 %v162
  %263 = vmatpush1.msra.mxu0 %v161
  %264 = vmatprep.subr.mxu0 %v240
  %265 = vmatpush1.msra.mxu0 %v239
  %266 = vmatprep.subr.mxu0 %v244
  %267 = vmatpush1.msra.mxu0 %v243
  %268 = vmatprep.subr.mxu0 0.0
  %269 = vmatpush1.msra.mxu0 0.0
  %270 = vmatprep.subr.mxu0 0.0
  %271 = vmatpush1.msra.mxu0 0.0
  %272 = vmatprep.subr.mxu0 0.0
  %273 = vmatpush1.msra.mxu0 0.0
  %274 = vmatprep.subr.mxu0 0.0
  %275 = vmatpush1.msra.mxu0 0.0
  %276 = vmatprep.subr.mxu0 0.0
  %277 = vmatpush1.msra.mxu0 0.0
  %278 = vmatprep.subr.mxu0 0.0
  %279 = vmatpush1.msra.mxu0 0.0
  %280 = vmatprep.subr.mxu0 0.0
  %281 = vmatpush1.msra.mxu0 0.0
  %282 = vmatprep.subr.mxu0 0.0
  %283 = vmatpush1.msra.mxu0 0.0
  %284 = vmatprep.subr.mxu0 0.0
  %285 = vmatpush1.msra.mxu0 0.0
  %286 = vmatprep.subr.mxu0 0.0
  %287 = vmatpush1.msra.mxu0 0.0
  %288 = vmatprep.subr.mxu0 0.0
  %289 = vmatpush1.msra.mxu0 0.0
  %290 = vmatprep.subr.mxu0 0.0
  %291 = vmatpush1.msra.mxu0 0.0
  %292 = vmatprep.subr.mxu0 0.0
  %293 = vmatpush1.msra.mxu0 0.0
  %294 = vmatprep.subr.mxu0 0.0
  %295 = vmatpush1.msra.mxu0 0.0
  %296 = vmatprep.subr.mxu0 0.0
  %297 = vmatpush1.msra.mxu0 0.0
  %298 = vmatprep.subr.mxu0 0.0
  %299 = vmatpush1.msra.mxu0 0.0
  %300 = vmatprep.subr.mxu0 0.0
  %301 = vmatpush1.msra.mxu0 0.0
  %302 = vmatprep.subr.mxu0 0.0
  %303 = vmatpush1.msra.mxu0 0.0
  %304 = vmatprep.subr.mxu0 0.0
  %305 = vmatpush1.msra.mxu0 0.0
  %306 = vmatprep.subr.mxu0 0.0
  %307 = vmatpush1.msra.mxu0 0.0
  %308 = vmatprep.subr.mxu0 0.0
  %309 = vmatpush1.msra.mxu0 0.0
  %310 = vmatprep.subr.mxu0 0.0
  %311 = vmatpush1.msra.mxu0 0.0
  %312 = vmatprep.subr.mxu0 0.0
  %313 = vmatpush1.msra.mxu0 0.0
  %314 = vmatprep.subr.mxu0 0.0
  %315 = vmatpush1.msra.mxu0 0.0
  %316 = vmatprep.subr.mxu0 0.0
  %317 = vmatpush1.msra.mxu0 0.0
  %318 = vmatprep.subr.mxu0 0.0
  %319 = vmatpush1.msra.mxu0 0.0
  %320 = vmatprep.mubr.f32.mxu0 0.0
  %321 = vmatmul.mubr.f32.gmra.mrb[0].mxu0 %v251
  %v322 = vpop.f32.mrb[0].mxu0
  %v323 = vadd.f32 0.0, %v322
  %v324 = vpop.f32.mrb[0].mxu0
  %v325 = vadd.f32 0.0, %v324
  %326 = vmatprep.mubr.f32.mxu0 0.0
  %327 = vmatmul.mubr.f32.gmra.mrb[0].mxu0 %v254
  %v328 = vpop.f32.mrb[0].mxu0
  %v329 = vadd.f32 0.0, %v328
  %v330 = vpop.f32.mrb[0].mxu0
  %v331 = vadd.f32 0.0, %v330
  %332 = vdwg.mxu0
  %333 = vmatprep.subr.mxu0 %v201
  %334 = vmatpush1.msra.mxu0 %v200
  %335 = vmatprep.subr.mxu0 %v205
  %336 = vmatpush1.msra.mxu0 %v204
  %337 = vmatprep.subr.mxu0 %v160
  %338 = vmatpush1.msra.mxu0 %v159
  %339 = vmatprep.subr.mxu0 %v164
  %340 = vmatpush1.msra.mxu0 %v163
  %341 = vmatprep.subr.mxu0 %v242
  %342 = vmatpush1.msra.mxu0 %v241
  %343 = vmatprep.subr.mxu0 %v246
  %344 = vmatpush1.msra.mxu0 %v245
  %345 = vmatprep.subr.mxu0 0.0
  %346 = vmatpush1.msra.mxu0 0.0
  %347 = vmatprep.subr.mxu0 0.0
  %348 = vmatpush1.msra.mxu0 0.0
  %349 = vmatprep.subr.mxu0 0.0
  %350 = vmatpush1.msra.mxu0 0.0
  %351 = vmatprep.subr.mxu0 0.0
  %352 = vmatpush1.msra.mxu0 0.0
  %353 = vmatprep.subr.mxu0 0.0
  %354 = vmatpush1.msra.mxu0 0.0
  %355 = vmatprep.subr.mxu0 0.0
  %356 = vmatpush1.msra.mxu0 0.0
  %357 = vmatprep.subr.mxu0 0.0
  %358 = vmatpush1.msra.mxu0 0.0
  %359 = vmatprep.subr.mxu0 0.0
  %360 = vmatpush1.msra.mxu0 0.0
  %361 = vmatprep.subr.mxu0 0.0
  %362 = vmatpush1.msra.mxu0 0.0
  %363 = vmatprep.subr.mxu0 0.0
  %364 = vmatpush1.msra.mxu0 0.0
  %365 = vmatprep.subr.mxu0 0.0
  %366 = vmatpush1.msra.mxu0 0.0
  %367 = vmatprep.subr.mxu0 0.0
  %368 = vmatpush1.msra.mxu0 0.0
  %369 = vmatprep.subr.mxu0 0.0
  %370 = vmatpush1.msra.mxu0 0.0
  %371 = vmatprep.subr.mxu0 0.0
  %372 = vmatpush1.msra.mxu0 0.0
  %373 = vmatprep.subr.mxu0 0.0
  %374 = vmatpush1.msra.mxu0 0.0
  %375 = vmatprep.subr.mxu0 0.0
  %376 = vmatpush1.msra.mxu0 0.0
  %377 = vmatprep.subr.mxu0 0.0
  %378 = vmatpush1.msra.mxu0 0.0
  %379 = vmatprep.subr.mxu0 0.0
  %380 = vmatpush1.msra.mxu0 0.0
  %381 = vmatprep.subr.mxu0 0.0
  %382 = vmatpush1.msra.mxu0 0.0
  %383 = vmatprep.subr.mxu0 0.0
  %384 = vmatpush1.msra.mxu0 0.0
  %385 = vmatprep.subr.mxu0 0.0
  %386 = vmatpush1.msra.mxu0 0.0
  %387 = vmatprep.subr.mxu0 0.0
  %388 = vmatpush1.msra.mxu0 0.0
  %389 = vmatprep.subr.mxu0 0.0
  %390 = vmatpush1.msra.mxu0 0.0
  %391 = vmatprep.subr.mxu0 0.0
  %392 = vmatpush1.msra.mxu0 0.0
  %393 = vmatprep.subr.mxu0 0.0
  %394 = vmatpush1.msra.mxu0 0.0
  %395 = vmatprep.subr.mxu0 0.0
  %396 = vmatpush1.msra.mxu0 0.0
  %397 = vmatprep.mubr.f32.mxu0 0.0
  %398 = vmatmul.mubr.f32.gmra.mrb[0].mxu0 %v251
  %v399 = vpop.f32.mrb[0].mxu0
  %v400 = vadd.f32 0.0, %v399
  %v401 = vpop.f32.mrb[0].mxu0
  %v402 = vadd.f32 0.0, %v401
  %403 = vmatprep.mubr.f32.mxu0 0.0
  %404 = vmatmul.mubr.f32.gmra.mrb[0].mxu0 %v254
  %v405 = vpop.f32.mrb[0].mxu0
  %v406 = vadd.f32 0.0, %v405
  %v407 = vpop.f32.mrb[0].mxu0
  %v408 = vadd.f32 0.0, %v407
  %409 = vdwg.mxu0
  %411 = vset.pattern.permute.xlu0 1
  %412 = vperm.xlu0 %411, %v156
  %v413 = vpop.permute.xlu0 %412
  %v415 = vadd.f32 %v323, %v413
  %v416 = vadd.f32 %v325, %v413
  %v417 = vadd.f32 %v400, %v413
  %v418 = vadd.f32 %v402, %v413
  %vm419 = vcmp.gt.f32.partialorder %v415, 0.0
  %vm420 = vcmp.gt.f32.partialorder %v416, 0.0
  %vm421 = vcmp.gt.f32.partialorder %v417, 0.0
  %vm422 = vcmp.gt.f32.partialorder %v418, 0.0
  %v423 = vmul.f32 %v415, 0.2
  %v424 = vmul.f32 %v416, 0.2
  %v425 = vmul.f32 %v417, 0.2
  %v426 = vmul.f32 %v418, 0.2
  %v427 = vsel %vm419, %v415, %v423
  %v428 = vsel %vm420, %v416, %v424
  %v429 = vsel %vm421, %v417, %v425
  %v430 = vsel %vm422, %v418, %v426
  %431 = vset.pattern.permute.xlu0 0
  %432 = vperm.xlu0 %431, %v156
  %v433 = vpop.permute.xlu0 %432
  %v435 = vadd.f32 %v329, %v433
  %v436 = vadd.f32 %v331, %v433
  %v437 = vadd.f32 %v406, %v433
  %v438 = vadd.f32 %v408, %v433
  %439 = vrot.lane.b32.xlu0 %v427, 1
  %v440 = vpop.permute.xlu0 %439
  %441 = vrot.lane.b32.xlu0 %v428, 1
  %v442 = vpop.permute.xlu0 %441
  %443 = vrot.lane.b32.xlu0 %v429, 1
  %v444 = vpop.permute.xlu0 %443
  %445 = vrot.lane.b32.xlu0 %v430, 1
  %v446 = vpop.permute.xlu0 %445
  %v447 = vsel %vm181, %v444, %v446
  %v448 = vsel %vm181, %v442, %v444
  %v449 = vsel %vm181, %v440, %v442
  %v450 = vsel %vm181, %v446, %v440
  %v451 = vsel %vm194, %v450, 0.0
  %v452 = vsel %vm195, %v449, 0.0
  %v453 = vsel %vm196, %v448, 0.0
  %v454 = vsel %vm197, %v447, 0.0
  %455 = vrot.lane.b32.xlu0 %v427, 127
  %v456 = vpop.permute.xlu0 %455
  %457 = vrot.lane.b32.xlu0 %v428, 127
  %v458 = vpop.permute.xlu0 %457
  %459 = vrot.lane.b32.xlu0 %v429, 127
  %v460 = vpop.permute.xlu0 %459
  %461 = vrot.lane.b32.xlu0 %v430, 127
  %v462 = vpop.permute.xlu0 %461
  %v463 = vsel %vm222, %v460, %v462
  %v464 = vsel %vm222, %v458, %v460
  %v465 = vsel %vm222, %v456, %v458
  %v466 = vsel %vm222, %v462, %v456
  %v467 = vsel %vm235, %v465, 0.0
  %v468 = vsel %vm236, %v464, 0.0
  %v469 = vsel %vm237, %v463, 0.0
  %v470 = vsel %vm238, %v466, 0.0
  %v471 = vld [vmem:[%s4] sm:$0xff]
  %472 = vset.pattern.permute.xlu0 2
  %473 = vperm.xlu0 %472, %v156
  %v474 = vpop.permute.xlu0 %473
  %vm476 = vcmask 195584
  %v478 = vsel %vm476, %v471, 0
  %480 = vmatprep.subr.mxu0 %v452
  %481 = vmatpush1.msra.mxu0 %v451
  %482 = vmatprep.subr.mxu0 %v428
  %483 = vmatpush1.msra.mxu0 %v427
  %484 = vmatprep.subr.mxu0 %v468
  %485 = vmatpush1.msra.mxu0 %v467
  %486 = vmatprep.subr.mxu0 0.0
  %487 = vmatpush1.msra.mxu0 0.0
  %488 = vmatprep.subr.mxu0 0.0
  %489 = vmatpush1.msra.mxu0 0.0
  %490 = vmatprep.subr.mxu0 0.0
  %491 = vmatpush1.msra.mxu0 0.0
  %492 = vmatprep.subr.mxu0 0.0
  %493 = vmatpush1.msra.mxu0 0.0
  %494 = vmatprep.subr.mxu0 0.0
  %495 = vmatpush1.msra.mxu0 0.0
  %496 = vmatprep.subr.mxu0 0.0
  %497 = vmatpush1.msra.mxu0 0.0
  %498 = vmatprep.subr.mxu0 0.0
  %499 = vmatpush1.msra.mxu0 0.0
  %500 = vmatprep.subr.mxu0 0.0
  %501 = vmatpush1.msra.mxu0 0.0
  %502 = vmatprep.subr.mxu0 0.0
  %503 = vmatpush1.msra.mxu0 0.0
  %504 = vmatprep.subr.mxu0 0.0
  %505 = vmatpush1.msra.mxu0 0.0
  %506 = vmatprep.subr.mxu0 0.0
  %507 = vmatpush1.msra.mxu0 0.0
  %508 = vmatprep.subr.mxu0 0.0
  %509 = vmatpush1.msra.mxu0 0.0
  %510 = vmatprep.subr.mxu0 0.0
  %511 = vmatpush1.msra.mxu0 0.0
  %512 = vmatprep.subr.mxu0 0.0
  %513 = vmatpush1.msra.mxu0 0.0
  %514 = vmatprep.subr.mxu0 0.0
  %515 = vmatpush1.msra.mxu0 0.0
  %516 = vmatprep.subr.mxu0 0.0
  %517 = vmatpush1.msra.mxu0 0.0
  %518 = vmatprep.subr.mxu0 0.0
  %519 = vmatpush1.msra.mxu0 0.0
  %520 = vmatprep.subr.mxu0 0.0
  %521 = vmatpush1.msra.mxu0 0.0
  %522 = vmatprep.subr.mxu0 0.0
  %523 = vmatpush1.msra.mxu0 0.0
  %524 = vmatprep.subr.mxu0 0.0
  %525 = vmatpush1.msra.mxu0 0.0
  %526 = vmatprep.subr.mxu0 0.0
  %527 = vmatpush1.msra.mxu0 0.0
  %528 = vmatprep.subr.mxu0 0.0
  %529 = vmatpush1.msra.mxu0 0.0
  %530 = vmatprep.subr.mxu0 0.0
  %531 = vmatpush1.msra.mxu0 0.0
  %532 = vmatprep.subr.mxu0 0.0
  %533 = vmatpush1.msra.mxu0 0.0
  %534 = vmatprep.subr.mxu0 0.0
  %535 = vmatpush1.msra.mxu0 0.0
  %536 = vmatprep.subr.mxu0 0.0
  %537 = vmatpush1.msra.mxu0 0.0
  %538 = vmatprep.subr.mxu0 0.0
  %539 = vmatpush1.msra.mxu0 0.0
  %540 = vmatprep.subr.mxu0 0.0
  %541 = vmatpush1.msra.mxu0 0.0
  %542 = vmatprep.subr.mxu0 0.0
  %543 = vmatpush1.msra.mxu0 0.0
  %544 = vmatprep.mubr.f32.mxu0 0.0
  %545 = vmatmul.mubr.f32.gmra.mrb[0].mxu0 %v478
  %v546 = vpop.f32.mrb[0].mxu0
  %v547 = vadd.f32 %v474, %v546
  %v548 = vpop.f32.mrb[0].mxu0
  %v549 = vadd.f32 %v474, %v548
  %550 = vdwg.mxu0
  %551 = vmatprep.subr.mxu0 %v454
  %552 = vmatpush1.msra.mxu0 %v453
  %553 = vmatprep.subr.mxu0 %v430
  %554 = vmatpush1.msra.mxu0 %v429
  %555 = vmatprep.subr.mxu0 %v470
  %556 = vmatpush1.msra.mxu0 %v469
  %557 = vmatprep.subr.mxu0 0.0
  %558 = vmatpush1.msra.mxu0 0.0
  %559 = vmatprep.subr.mxu0 0.0
  %560 = vmatpush1.msra.mxu0 0.0
  %561 = vmatprep.subr.mxu0 0.0
  %562 = vmatpush1.msra.mxu0 0.0
  %563 = vmatprep.subr.mxu0 0.0
  %564 = vmatpush1.msra.mxu0 0.0
  %565 = vmatprep.subr.mxu0 0.0
  %566 = vmatpush1.msra.mxu0 0.0
  %567 = vmatprep.subr.mxu0 0.0
  %568 = vmatpush1.msra.mxu0 0.0
  %569 = vmatprep.subr.mxu0 0.0
  %570 = vmatpush1.msra.mxu0 0.0
  %571 = vmatprep.subr.mxu0 0.0
  %572 = vmatpush1.msra.mxu0 0.0
  %573 = vmatprep.subr.mxu0 0.0
  %574 = vmatpush1.msra.mxu0 0.0
  %575 = vmatprep.subr.mxu0 0.0
  %576 = vmatpush1.msra.mxu0 0.0
  %577 = vmatprep.subr.mxu0 0.0
  %578 = vmatpush1.msra.mxu0 0.0
  %579 = vmatprep.subr.mxu0 0.0
  %580 = vmatpush1.msra.mxu0 0.0
  %581 = vmatprep.subr.mxu0 0.0
  %582 = vmatpush1.msra.mxu0 0.0
  %583 = vmatprep.subr.mxu0 0.0
  %584 = vmatpush1.msra.mxu0 0.0
  %585 = vmatprep.subr.mxu0 0.0
  %586 = vmatpush1.msra.mxu0 0.0
  %587 = vmatprep.subr.mxu0 0.0
  %588 = vmatpush1.msra.mxu0 0.0
  %589 = vmatprep.subr.mxu0 0.0
  %590 = vmatpush1.msra.mxu0 0.0
  %591 = vmatprep.subr.mxu0 0.0
  %592 = vmatpush1.msra.mxu0 0.0
  %593 = vmatprep.subr.mxu0 0.0
  %594 = vmatpush1.msra.mxu0 0.0
  %595 = vmatprep.subr.mxu0 0.0
  %596 = vmatpush1.msra.mxu0 0.0
  %597 = vmatprep.subr.mxu0 0.0
  %598 = vmatpush1.msra.mxu0 0.0
  %599 = vmatprep.subr.mxu0 0.0
  %600 = vmatpush1.msra.mxu0 0.0
  %601 = vmatprep.subr.mxu0 0.0
  %602 = vmatpush1.msra.mxu0 0.0
  %603 = vmatprep.subr.mxu0 0.0
  %604 = vmatpush1.msra.mxu0 0.0
  %605 = vmatprep.subr.mxu0 0.0
  %606 = vmatpush1.msra.mxu0 0.0
  %607 = vmatprep.subr.mxu0 0.0
  %608 = vmatpush1.msra.mxu0 0.0
  %609 = vmatprep.subr.mxu0 0.0
  %610 = vmatpush1.msra.mxu0 0.0
  %611 = vmatprep.subr.mxu0 0.0
  %612 = vmatpush1.msra.mxu0 0.0
  %613 = vmatprep.subr.mxu0 0.0
  %614 = vmatpush1.msra.mxu0 0.0
  %615 = vmatprep.mubr.f32.mxu0 0.0
  %616 = vmatmul.mubr.f32.gmra.mrb[0].mxu0 %v478
  %v617 = vpop.f32.mrb[0].mxu0
  %v618 = vadd.f32 %v474, %v617
  %v619 = vpop.f32.mrb[0].mxu0
  %v620 = vadd.f32 %v474, %v619
  %621 = vdwg.mxu0
  %vm622 = vcmp.gt.f32.partialorder %v547, 0.0
  %vm623 = vcmp.gt.f32.partialorder %v549, 0.0
  %vm624 = vcmp.gt.f32.partialorder %v618, 0.0
  %vm625 = vcmp.gt.f32.partialorder %v620, 0.0
  %v626 = vmul.f32 %v547, 0.2
  %v627 = vmul.f32 %v549, 0.2
  %v628 = vmul.f32 %v618, 0.2
  %v629 = vmul.f32 %v620, 0.2
  %v630 = vsel %vm622, %v547, %v626
  %v631 = vsel %vm623, %v549, %v627
  %v632 = vsel %vm624, %v618, %v628
  %v633 = vsel %vm625, %v620, %v629
  %v634 = vadd.f32 %v630, %v435
  %v635 = vadd.f32 %v631, %v436
  %v636 = vadd.f32 %v632, %v437
  %v637 = vadd.f32 %v633, %v438
  %638 = vrot.lane.b32.xlu0 %v634, 127
  %v639 = vpop.permute.xlu0 %638
  %640 = vrot.lane.b32.xlu0 %v635, 127
  %v641 = vpop.permute.xlu0 %640
  %642 = vrot.lane.b32.xlu0 %v636, 127
  %v643 = vpop.permute.xlu0 %642
  %644 = vrot.lane.b32.xlu0 %v637, 127
  %v645 = vpop.permute.xlu0 %644
  %v646 = vsel %vm222, %v643, %v645
  %v647 = vsel %vm222, %v641, %v643
  %v648 = vsel %vm222, %v639, %v641
  %v649 = vsel %vm222, %v645, %v639
  %v650 = vmax.f32 %v634, %v648
  %v651 = vmax.f32 %v635, %v647
  %v652 = vmax.f32 %v636, %v646
  %v653 = vmax.f32 %v637, %v649
  %654 = vrot.lane.b32.xlu0 %v650, 2
  %v655 = vpop.permute.xlu0 %654
  %656 = vrot.lane.b32.xlu0 %v651, 2
  %v657 = vpop.permute.xlu0 %656
  %658 = vrot.lane.b32.xlu0 %v652, 2
  %v659 = vpop.permute.xlu0 %658
  %660 = vrot.lane.b32.xlu0 %v653, 2
  %v661 = vpop.permute.xlu0 %660
  %vm662 = vcmp.lt.s32.totalorder %v36, 2
  %v663 = vsel %vm662, %v659, %v661
  %v664 = vsel %vm662, %v657, %v659
  %v665 = vsel %vm662, %v655, %v657
  %v666 = vsel %vm662, %v661, %v655
  %v667 = vsel %vm148, 1, 0
  %v668 = vsel %vm149, 1, 0
  %v669 = vsel %vm150, 1, 0
  %v670 = vsel %vm151, 1, 0
  %vm671 = vcmp.eq.s32.totalorder %v667, 1
  %vm672 = vcmp.eq.s32.totalorder %v668, 1
  %vm673 = vcmp.eq.s32.totalorder %v669, 1
  %vm674 = vcmp.eq.s32.totalorder %v670, 1
  %v675 = vsel %vm671, %v666, 0.0
  %v676 = vsel %vm672, %v665, 0.0
  %v677 = vsel %vm673, %v664, 0.0
  %v678 = vsel %vm674, %v663, 0.0
  %679 = vrot.lane.b32.xlu0 %v650, 126
  %v680 = vpop.permute.xlu0 %679
  %681 = vrot.lane.b32.xlu0 %v651, 126
  %v682 = vpop.permute.xlu0 %681
  %683 = vrot.lane.b32.xlu0 %v652, 126
  %v684 = vpop.permute.xlu0 %683
  %685 = vrot.lane.b32.xlu0 %v653, 126
  %v686 = vpop.permute.xlu0 %685
  %vm687 = vcmp.lt.s32.totalorder %v36, 126
  %v688 = vsel %vm687, %v684, %v686
  %v689 = vsel %vm687, %v682, %v684
  %v690 = vsel %vm687, %v680, %v682
  %v691 = vsel %vm687, %v686, %v680
  %v692 = vsel %vm152, 1, 0
  %v693 = vsel %vm153, 1, 0
  %v694 = vsel %vm154, 1, 0
  %v695 = vsel %vm155, 1, 0
  %vm696 = vcmp.eq.s32.totalorder %v692, 1
  %vm697 = vcmp.eq.s32.totalorder %v693, 1
  %vm698 = vcmp.eq.s32.totalorder %v694, 1
  %vm699 = vcmp.eq.s32.totalorder %v695, 1
  %v700 = vsel %vm696, %v690, 0.0
  %v701 = vsel %vm697, %v689, 0.0
  %v702 = vsel %vm698, %v688, 0.0
  %v703 = vsel %vm699, %v691, 0.0
  %v704 = vld [vmem:[%s5] sm:$0xff]
  %v706 = vsel %vm476, %v704, 0
  %708 = vmatprep.subr.mxu0 %v676
  %709 = vmatpush1.msra.mxu0 %v675
  %710 = vmatprep.subr.mxu0 %v651
  %711 = vmatpush1.msra.mxu0 %v650
  %712 = vmatprep.subr.mxu0 %v701
  %713 = vmatpush1.msra.mxu0 %v700
  %714 = vmatprep.subr.mxu0 0.0
  %715 = vmatpush1.msra.mxu0 0.0
  %716 = vmatprep.subr.mxu0 0.0
  %717 = vmatpush1.msra.mxu0 0.0
  %718 = vmatprep.subr.mxu0 0.0
  %719 = vmatpush1.msra.mxu0 0.0
  %720 = vmatprep.subr.mxu0 0.0
  %721 = vmatpush1.msra.mxu0 0.0
  %722 = vmatprep.subr.mxu0 0.0
  %723 = vmatpush1.msra.mxu0 0.0
  %724 = vmatprep.subr.mxu0 0.0
  %725 = vmatpush1.msra.mxu0 0.0
  %726 = vmatprep.subr.mxu0 0.0
  %727 = vmatpush1.msra.mxu0 0.0
  %728 = vmatprep.subr.mxu0 0.0
  %729 = vmatpush1.msra.mxu0 0.0
  %730 = vmatprep.subr.mxu0 0.0
  %731 = vmatpush1.msra.mxu0 0.0
  %732 = vmatprep.subr.mxu0 0.0
  %733 = vmatpush1.msra.mxu0 0.0
  %734 = vmatprep.subr.mxu0 0.0
  %735 = vmatpush1.msra.mxu0 0.0
  %736 = vmatprep.subr.mxu0 0.0
  %737 = vmatpush1.msra.mxu0 0.0
  %738 = vmatprep.subr.mxu0 0.0
  %739 = vmatpush1.msra.mxu0 0.0
  %740 = vmatprep.subr.mxu0 0.0
  %741 = vmatpush1.msra.mxu0 0.0
  %742 = vmatprep.subr.mxu0 0.0
  %743 = vmatpush1.msra.mxu0 0.0
  %744 = vmatprep.subr.mxu0 0.0
  %745 = vmatpush1.msra.mxu0 0.0
  %746 = vmatprep.subr.mxu0 0.0
  %747 = vmatpush1.msra.mxu0 0.0
  %748 = vmatprep.subr.mxu0 0.0
  %749 = vmatpush1.msra.mxu0 0.0
  %750 = vmatprep.subr.mxu0 0.0
  %751 = vmatpush1.msra.mxu0 0.0
  %752 = vmatprep.subr.mxu0 0.0
  %753 = vmatpush1.msra.mxu0 0.0
  %754 = vmatprep.subr.mxu0 0.0
  %755 = vmatpush1.msra.mxu0 0.0
  %756 = vmatprep.subr.mxu0 0.0
  %757 = vmatpush1.msra.mxu0 0.0
  %758 = vmatprep.subr.mxu0 0.0
  %759 = vmatpush1.msra.mxu0 0.0
  %760 = vmatprep.subr.mxu0 0.0
  %761 = vmatpush1.msra.mxu0 0.0
  %762 = vmatprep.subr.mxu0 0.0
  %763 = vmatpush1.msra.mxu0 0.0
  %764 = vmatprep.subr.mxu0 0.0
  %765 = vmatpush1.msra.mxu0 0.0
  %766 = vmatprep.subr.mxu0 0.0
  %767 = vmatpush1.msra.mxu0 0.0
  %768 = vmatprep.subr.mxu0 0.0
  %769 = vmatpush1.msra.mxu0 0.0
  %770 = vmatprep.subr.mxu0 0.0
  %771 = vmatpush1.msra.mxu0 0.0
  %772 = vmatprep.mubr.f32.mxu0 0.0
  %773 = vmatmul.mubr.f32.gmra.mrb[0].mxu0 %v706
  %v774 = vpop.f32.mrb[0].mxu0
  %v775 = vadd.f32 0.0, %v774
  %v776 = vpop.f32.mrb[0].mxu0
  %v777 = vadd.f32 0.0, %v776
  %778 = vdwg.mxu0
  %779 = vmatprep.subr.mxu0 %v678
  %780 = vmatpush1.msra.mxu0 %v677
  %781 = vmatprep.subr.mxu0 %v653
  %782 = vmatpush1.msra.mxu0 %v652
  %783 = vmatprep.subr.mxu0 %v703
  %784 = vmatpush1.msra.mxu0 %v702
  %785 = vmatprep.subr.mxu0 0.0
  %786 = vmatpush1.msra.mxu0 0.0
  %787 = vmatprep.subr.mxu0 0.0
  %788 = vmatpush1.msra.mxu0 0.0
  %789 = vmatprep.subr.mxu0 0.0
  %790 = vmatpush1.msra.mxu0 0.0
  %791 = vmatprep.subr.mxu0 0.0
  %792 = vmatpush1.msra.mxu0 0.0
  %793 = vmatprep.subr.mxu0 0.0
  %794 = vmatpush1.msra.mxu0 0.0
  %795 = vmatprep.subr.mxu0 0.0
  %796 = vmatpush1.msra.mxu0 0.0
  %797 = vmatprep.subr.mxu0 0.0
  %798 = vmatpush1.msra.mxu0 0.0
  %799 = vmatprep.subr.mxu0 0.0
  %800 = vmatpush1.msra.mxu0 0.0
  %801 = vmatprep.subr.mxu0 0.0
  %802 = vmatpush1.msra.mxu0 0.0
  %803 = vmatprep.subr.mxu0 0.0
  %804 = vmatpush1.msra.mxu0 0.0
  %805 = vmatprep.subr.mxu0 0.0
  %806 = vmatpush1.msra.mxu0 0.0
  %807 = vmatprep.subr.mxu0 0.0
  %808 = vmatpush1.msra.mxu0 0.0
  %809 = vmatprep.subr.mxu0 0.0
  %810 = vmatpush1.msra.mxu0 0.0
  %811 = vmatprep.subr.mxu0 0.0
  %812 = vmatpush1.msra.mxu0 0.0
  %813 = vmatprep.subr.mxu0 0.0
  %814 = vmatpush1.msra.mxu0 0.0
  %815 = vmatprep.subr.mxu0 0.0
  %816 = vmatpush1.msra.mxu0 0.0
  %817 = vmatprep.subr.mxu0 0.0
  %818 = vmatpush1.msra.mxu0 0.0
  %819 = vmatprep.subr.mxu0 0.0
  %820 = vmatpush1.msra.mxu0 0.0
  %821 = vmatprep.subr.mxu0 0.0
  %822 = vmatpush1.msra.mxu0 0.0
  %823 = vmatprep.subr.mxu0 0.0
  %824 = vmatpush1.msra.mxu0 0.0
  %825 = vmatprep.subr.mxu0 0.0
  %826 = vmatpush1.msra.mxu0 0.0
  %827 = vmatprep.subr.mxu0 0.0
  %828 = vmatpush1.msra.mxu0 0.0
  %829 = vmatprep.subr.mxu0 0.0
  %830 = vmatpush1.msra.mxu0 0.0
  %831 = vmatprep.subr.mxu0 0.0
  %832 = vmatpush1.msra.mxu0 0.0
  %833 = vmatprep.subr.mxu0 0.0
  %834 = vmatpush1.msra.mxu0 0.0
  %835 = vmatprep.subr.mxu0 0.0
  %836 = vmatpush1.msra.mxu0 0.0
  %837 = vmatprep.subr.mxu0 0.0
  %838 = vmatpush1.msra.mxu0 0.0
  %839 = vmatprep.subr.mxu0 0.0
  %840 = vmatpush1.msra.mxu0 0.0
  %841 = vmatprep.subr.mxu0 0.0
  %842 = vmatpush1.msra.mxu0 0.0
  %843 = vmatprep.mubr.f32.mxu0 0.0
  %844 = vmatmul.mubr.f32.gmra.mrb[0].mxu0 %v706
  %v845 = vpop.f32.mrb[0].mxu0
  %v846 = vadd.f32 0.0, %v845
  %v847 = vpop.f32.mrb[0].mxu0
  %v848 = vadd.f32 0.0, %v847
  %849 = vdwg.mxu0
  %v850 = vsel %vm136, 1, 0
  %v851 = vsel %vm137, 1, 0
  %v852 = vsel %vm138, 1, 0
  %v853 = vsel %vm139, 1, 0
  %vm854 = vcmp.eq.s32.totalorder %v850, 1
  %vm855 = vcmp.eq.s32.totalorder %v851, 1
  %vm856 = vcmp.eq.s32.totalorder %v852, 1
  %vm857 = vcmp.eq.s32.totalorder %v853, 1
  %v858 = vsel %vm854, %v775, 0.0
  %v859 = vsel %vm855, %v777, 0.0
  %v860 = vsel %vm856, %v846, 0.0
  %v861 = vsel %vm857, %v848, 0.0
  %v862 = vadd.f32 %v858, %v859
  %v863 = vadd.f32 %v862, %v860
  %v864 = vadd.f32 %v863, %v861
  %865 = vadd.xlane.f32.xlu0 %v864
  %v866 = vpop.xlane.xlu0 %865
  %v867 = vmul.f32 %v858, %v858
  %v868 = vmul.f32 %v859, %v859
  %v869 = vmul.f32 %v860, %v860
  %v870 = vmul.f32 %v861, %v861
  %v871 = vadd.f32 %v867, %v868
  %v872 = vadd.f32 %v871, %v869
  %v873 = vadd.f32 %v872, %v870
  %874 = vadd.xlane.f32.xlu0 %v873
  %v875 = vpop.xlane.xlu0 %874
  %v876 = vmul.f32 %v866, 0.00390625
  %v877 = vmul.f32 %v875, 0.00390625
  %v878 = vmul.f32 %v876, %v876
  %v879 = vsub.f32 %v877, %v878
  %v880 = vmax.f32 %v879, 0.0
  %v881 = vadd.f32 %v880, 1e-05
  %v882 = vrsqrt.pop %v881
  %v883 = vmul.f32 %v156, %v882
  %v884 = vmul.f32 %v876, %v883
  %886 = vrot.lane.b32.xlu0 %v884, 1
  %v887 = vpop.permute.xlu0 %886
  %v889 = vsub.f32 %v156, %v887
  %891 = vset.pattern.permute.xlu0 4
  %892 = vperm.xlu0 %891, %v883
  %v893 = vpop.permute.xlu0 %892
  %v895 = vmul.f32 %v775, %v893
  %v896 = vmul.f32 %v777, %v893
  %v897 = vmul.f32 %v846, %v893
  %v898 = vmul.f32 %v848, %v893
  %900 = vset.pattern.permute.xlu0 5
  %901 = vperm.xlu0 %900, %v889
  %v902 = vpop.permute.xlu0 %901
  %v904 = vadd.f32 %v895, %v902
  %v905 = vadd.f32 %v896, %v902
  %v906 = vadd.f32 %v897, %v902
  %v907 = vadd.f32 %v898, %v902
  %vm908 = vcmp.gt.f32.partialorder %v904, 0.0
  %vm909 = vcmp.gt.f32.partialorder %v905, 0.0
  %vm910 = vcmp.gt.f32.partialorder %v906, 0.0
  %vm911 = vcmp.gt.f32.partialorder %v907, 0.0
  %v912 = vmul.f32 %v904, 0.2
  %v913 = vmul.f32 %v905, 0.2
  %v914 = vmul.f32 %v906, 0.2
  %v915 = vmul.f32 %v907, 0.2
  %v916 = vsel %vm908, %v904, %v912
  %v917 = vsel %vm909, %v905, %v913
  %v918 = vsel %vm910, %v906, %v914
  %v919 = vsel %vm911, %v907, %v915
  %920 = vrot.lane.b32.xlu0 %v916, 2
  %v921 = vpop.permute.xlu0 %920
  %922 = vrot.lane.b32.xlu0 %v917, 2
  %v923 = vpop.permute.xlu0 %922
  %924 = vrot.lane.b32.xlu0 %v918, 2
  %v925 = vpop.permute.xlu0 %924
  %926 = vrot.lane.b32.xlu0 %v919, 2
  %v927 = vpop.permute.xlu0 %926
  %v928 = vsel %vm662, %v925, %v927
  %v929 = vsel %vm662, %v923, %v925
  %v930 = vsel %vm662, %v921, %v923
  %v931 = vsel %vm662, %v927, %v921
  %v932 = vsel %vm671, %v931, 0.0
  %v933 = vsel %vm672, %v930, 0.0
  %v934 = vsel %vm673, %v929, 0.0
  %v935 = vsel %vm674, %v928, 0.0
  %936 = vrot.lane.b32.xlu0 %v916, 126
  %v937 = vpop.permute.xlu0 %936
  %938 = vrot.lane.b32.xlu0 %v917, 126
  %v939 = vpop.permute.xlu0 %938
  %940 = vrot.lane.b32.xlu0 %v918, 126
  %v941 = vpop.permute.xlu0 %940
  %942 = vrot.lane.b32.xlu0 %v919, 126
  %v943 = vpop.permute.xlu0 %942
  %v944 = vsel %vm687, %v941, %v943
  %v945 = vsel %vm687, %v939, %v941
  %v946 = vsel %vm687, %v937, %v939
  %v947 = vsel %vm687, %v943, %v937
  %v948 = vsel %vm696, %v946, 0.0
  %v949 = vsel %vm697, %v945, 0.0
  %v950 = vsel %vm698, %v944, 0.0
  %v951 = vsel %vm699, %v947, 0.0
  %v952 = vld [vmem:[%s6] sm:$0xff]
  %v954 = vsel %vm476, %v952, 0
  %956 = vmatprep.subr.mxu0 %v933
  %957 = vmatpush1.msra.mxu0 %v932
  %958 = vmatprep.subr.mxu0 %v917
  %959 = vmatpush1.msra.mxu0 %v916
  %960 = vmatprep.subr.mxu0 %v949
  %961 = vmatpush1.msra.mxu0 %v948
  %962 = vmatprep.subr.mxu0 0.0
  %963 = vmatpush1.msra.mxu0 0.0
  %964 = vmatprep.subr.mxu0 0.0
  %965 = vmatpush1.msra.mxu0 0.0
  %966 = vmatprep.subr.mxu0 0.0
  %967 = vmatpush1.msra.mxu0 0.0
  %968 = vmatprep.subr.mxu0 0.0
  %969 = vmatpush1.msra.mxu0 0.0
  %970 = vmatprep.subr.mxu0 0.0
  %971 = vmatpush1.msra.mxu0 0.0
  %972 = vmatprep.subr.mxu0 0.0
  %973 = vmatpush1.msra.mxu0 0.0
  %974 = vmatprep.subr.mxu0 0.0
  %975 = vmatpush1.msra.mxu0 0.0
  %976 = vmatprep.subr.mxu0 0.0
  %977 = vmatpush1.msra.mxu0 0.0
  %978 = vmatprep.subr.mxu0 0.0
  %979 = vmatpush1.msra.mxu0 0.0
  %980 = vmatprep.subr.mxu0 0.0
  %981 = vmatpush1.msra.mxu0 0.0
  %982 = vmatprep.subr.mxu0 0.0
  %983 = vmatpush1.msra.mxu0 0.0
  %984 = vmatprep.subr.mxu0 0.0
  %985 = vmatpush1.msra.mxu0 0.0
  %986 = vmatprep.subr.mxu0 0.0
  %987 = vmatpush1.msra.mxu0 0.0
  %988 = vmatprep.subr.mxu0 0.0
  %989 = vmatpush1.msra.mxu0 0.0
  %990 = vmatprep.subr.mxu0 0.0
  %991 = vmatpush1.msra.mxu0 0.0
  %992 = vmatprep.subr.mxu0 0.0
  %993 = vmatpush1.msra.mxu0 0.0
  %994 = vmatprep.subr.mxu0 0.0
  %995 = vmatpush1.msra.mxu0 0.0
  %996 = vmatprep.subr.mxu0 0.0
  %997 = vmatpush1.msra.mxu0 0.0
  %998 = vmatprep.subr.mxu0 0.0
  %999 = vmatpush1.msra.mxu0 0.0
  %1000 = vmatprep.subr.mxu0 0.0
  %1001 = vmatpush1.msra.mxu0 0.0
  %1002 = vmatprep.subr.mxu0 0.0
  %1003 = vmatpush1.msra.mxu0 0.0
  %1004 = vmatprep.subr.mxu0 0.0
  %1005 = vmatpush1.msra.mxu0 0.0
  %1006 = vmatprep.subr.mxu0 0.0
  %1007 = vmatpush1.msra.mxu0 0.0
  %1008 = vmatprep.subr.mxu0 0.0
  %1009 = vmatpush1.msra.mxu0 0.0
  %1010 = vmatprep.subr.mxu0 0.0
  %1011 = vmatpush1.msra.mxu0 0.0
  %1012 = vmatprep.subr.mxu0 0.0
  %1013 = vmatpush1.msra.mxu0 0.0
  %1014 = vmatprep.subr.mxu0 0.0
  %1015 = vmatpush1.msra.mxu0 0.0
  %1016 = vmatprep.subr.mxu0 0.0
  %1017 = vmatpush1.msra.mxu0 0.0
  %1018 = vmatprep.subr.mxu0 0.0
  %1019 = vmatpush1.msra.mxu0 0.0
  %1020 = vmatprep.mubr.f32.mxu0 0.0
  %1021 = vmatmul.mubr.f32.gmra.mrb[0].mxu0 %v954
  %v1022 = vpop.f32.mrb[0].mxu0
  %v1023 = vadd.f32 0.0, %v1022
  %v1024 = vpop.f32.mrb[0].mxu0
  %v1025 = vadd.f32 0.0, %v1024
  %1026 = vdwg.mxu0
  %1027 = vmatprep.subr.mxu0 %v935
  %1028 = vmatpush1.msra.mxu0 %v934
  %1029 = vmatprep.subr.mxu0 %v919
  %1030 = vmatpush1.msra.mxu0 %v918
  %1031 = vmatprep.subr.mxu0 %v951
  %1032 = vmatpush1.msra.mxu0 %v950
  %1033 = vmatprep.subr.mxu0 0.0
  %1034 = vmatpush1.msra.mxu0 0.0
  %1035 = vmatprep.subr.mxu0 0.0
  %1036 = vmatpush1.msra.mxu0 0.0
  %1037 = vmatprep.subr.mxu0 0.0
  %1038 = vmatpush1.msra.mxu0 0.0
  %1039 = vmatprep.subr.mxu0 0.0
  %1040 = vmatpush1.msra.mxu0 0.0
  %1041 = vmatprep.subr.mxu0 0.0
  %1042 = vmatpush1.msra.mxu0 0.0
  %1043 = vmatprep.subr.mxu0 0.0
  %1044 = vmatpush1.msra.mxu0 0.0
  %1045 = vmatprep.subr.mxu0 0.0
  %1046 = vmatpush1.msra.mxu0 0.0
  %1047 = vmatprep.subr.mxu0 0.0
  %1048 = vmatpush1.msra.mxu0 0.0
  %1049 = vmatprep.subr.mxu0 0.0
  %1050 = vmatpush1.msra.mxu0 0.0
  %1051 = vmatprep.subr.mxu0 0.0
  %1052 = vmatpush1.msra.mxu0 0.0
  %1053 = vmatprep.subr.mxu0 0.0
  %1054 = vmatpush1.msra.mxu0 0.0
  %1055 = vmatprep.subr.mxu0 0.0
  %1056 = vmatpush1.msra.mxu0 0.0
  %1057 = vmatprep.subr.mxu0 0.0
  %1058 = vmatpush1.msra.mxu0 0.0
  %1059 = vmatprep.subr.mxu0 0.0
  %1060 = vmatpush1.msra.mxu0 0.0
  %1061 = vmatprep.subr.mxu0 0.0
  %1062 = vmatpush1.msra.mxu0 0.0
  %1063 = vmatprep.subr.mxu0 0.0
  %1064 = vmatpush1.msra.mxu0 0.0
  %1065 = vmatprep.subr.mxu0 0.0
  %1066 = vmatpush1.msra.mxu0 0.0
  %1067 = vmatprep.subr.mxu0 0.0
  %1068 = vmatpush1.msra.mxu0 0.0
  %1069 = vmatprep.subr.mxu0 0.0
  %1070 = vmatpush1.msra.mxu0 0.0
  %1071 = vmatprep.subr.mxu0 0.0
  %1072 = vmatpush1.msra.mxu0 0.0
  %1073 = vmatprep.subr.mxu0 0.0
  %1074 = vmatpush1.msra.mxu0 0.0
  %1075 = vmatprep.subr.mxu0 0.0
  %1076 = vmatpush1.msra.mxu0 0.0
  %1077 = vmatprep.subr.mxu0 0.0
  %1078 = vmatpush1.msra.mxu0 0.0
  %1079 = vmatprep.subr.mxu0 0.0
  %1080 = vmatpush1.msra.mxu0 0.0
  %1081 = vmatprep.subr.mxu0 0.0
  %1082 = vmatpush1.msra.mxu0 0.0
  %1083 = vmatprep.subr.mxu0 0.0
  %1084 = vmatpush1.msra.mxu0 0.0
  %1085 = vmatprep.subr.mxu0 0.0
  %1086 = vmatpush1.msra.mxu0 0.0
  %1087 = vmatprep.subr.mxu0 0.0
  %1088 = vmatpush1.msra.mxu0 0.0
  %1089 = vmatprep.subr.mxu0 0.0
  %1090 = vmatpush1.msra.mxu0 0.0
  %1091 = vmatprep.mubr.f32.mxu0 0.0
  %1092 = vmatmul.mubr.f32.gmra.mrb[0].mxu0 %v954
  %v1093 = vpop.f32.mrb[0].mxu0
  %v1094 = vadd.f32 0.0, %v1093
  %v1095 = vpop.f32.mrb[0].mxu0
  %v1096 = vadd.f32 0.0, %v1095
  %1097 = vdwg.mxu0
  %v1098 = vsel %vm854, %v1023, 0.0
  %v1099 = vsel %vm855, %v1025, 0.0
  %v1100 = vsel %vm856, %v1094, 0.0
  %v1101 = vsel %vm857, %v1096, 0.0
  %v1102 = vadd.f32 %v1098, %v1099
  %v1103 = vadd.f32 %v1102, %v1100
  %v1104 = vadd.f32 %v1103, %v1101
  %1105 = vadd.xlane.f32.xlu0 %v1104
  %v1106 = vpop.xlane.xlu0 %1105
  %v1107 = vmul.f32 %v1098, %v1098
  %v1108 = vmul.f32 %v1099, %v1099
  %v1109 = vmul.f32 %v1100, %v1100
  %v1110 = vmul.f32 %v1101, %v1101
  %v1111 = vadd.f32 %v1107, %v1108
  %v1112 = vadd.f32 %v1111, %v1109
  %v1113 = vadd.f32 %v1112, %v1110
  %1114 = vadd.xlane.f32.xlu0 %v1113
  %v1115 = vpop.xlane.xlu0 %1114
  %v1116 = vmul.f32 %v1106, 0.00390625
  %v1117 = vmul.f32 %v1115, 0.00390625
  %v1118 = vmul.f32 %v1116, %v1116
  %v1119 = vsub.f32 %v1117, %v1118
  %v1120 = vmax.f32 %v1119, 0.0
  %v1121 = vadd.f32 %v1120, 1e-05
  %v1122 = vrsqrt.pop %v1121
  %v1123 = vmul.f32 %v156, %v1122
  %v1124 = vmul.f32 %v1116, %v1123
  %1126 = vrot.lane.b32.xlu0 %v1124, 1
  %v1127 = vpop.permute.xlu0 %1126
  %v1129 = vsub.f32 %v156, %v1127
  %1131 = vset.pattern.permute.xlu0 6
  %1132 = vperm.xlu0 %1131, %v1123
  %v1133 = vpop.permute.xlu0 %1132
  %v1135 = vmul.f32 %v1023, %v1133
  %v1136 = vmul.f32 %v1025, %v1133
  %v1137 = vmul.f32 %v1094, %v1133
  %v1138 = vmul.f32 %v1096, %v1133
  %1140 = vset.pattern.permute.xlu0 7
  %1141 = vperm.xlu0 %1140, %v1129
  %v1142 = vpop.permute.xlu0 %1141
  %v1144 = vadd.f32 %v1135, %v1142
  %v1145 = vadd.f32 %v1136, %v1142
  %v1146 = vadd.f32 %v1137, %v1142
  %v1147 = vadd.f32 %v1138, %v1142
  %vm1148 = vcmp.gt.f32.partialorder %v1144, 0.0
  %vm1149 = vcmp.gt.f32.partialorder %v1145, 0.0
  %vm1150 = vcmp.gt.f32.partialorder %v1146, 0.0
  %vm1151 = vcmp.gt.f32.partialorder %v1147, 0.0
  %v1152 = vmul.f32 %v1144, 0.2
  %v1153 = vmul.f32 %v1145, 0.2
  %v1154 = vmul.f32 %v1146, 0.2
  %v1155 = vmul.f32 %v1147, 0.2
  %v1156 = vsel %vm1148, %v1144, %v1152
  %v1157 = vsel %vm1149, %v1145, %v1153
  %v1158 = vsel %vm1150, %v1146, %v1154
  %v1159 = vsel %vm1151, %v1147, %v1155
  %v1160 = vld [vmem:[%s1] sm:$0xff]
  %v1161 = vld [vmem:[%s1 + $0x8] sm:$0xff]
  %v1162 = vld [vmem:[%s1 + $0x10] sm:$0xff]
  %v1163 = vld [vmem:[%s1 + $0x18] sm:$0xff]
  %v1164 = vld [vmem:[%s3] sm:$0xff]
  %vm1165 = vcmask 64512
  %v1167 = vsel %vm1165, %v1164, 0
  %1169 = vmatprep.subr.mxu0 %v1161
  %1170 = vmatpush1.msra.mxu0 %v1160
  %1171 = vmatprep.subr.mxu0 0.0
  %1172 = vmatpush1.msra.mxu0 0.0
  %1173 = vmatprep.subr.mxu0 0.0
  %1174 = vmatpush1.msra.mxu0 0.0
  %1175 = vmatprep.subr.mxu0 0.0
  %1176 = vmatpush1.msra.mxu0 0.0
  %1177 = vmatprep.subr.mxu0 0.0
  %1178 = vmatpush1.msra.mxu0 0.0
  %1179 = vmatprep.subr.mxu0 0.0
  %1180 = vmatpush1.msra.mxu0 0.0
  %1181 = vmatprep.subr.mxu0 0.0
  %1182 = vmatpush1.msra.mxu0 0.0
  %1183 = vmatprep.subr.mxu0 0.0
  %1184 = vmatpush1.msra.mxu0 0.0
  %1185 = vmatprep.subr.mxu0 0.0
  %1186 = vmatpush1.msra.mxu0 0.0
  %1187 = vmatprep.subr.mxu0 0.0
  %1188 = vmatpush1.msra.mxu0 0.0
  %1189 = vmatprep.subr.mxu0 0.0
  %1190 = vmatpush1.msra.mxu0 0.0
  %1191 = vmatprep.subr.mxu0 0.0
  %1192 = vmatpush1.msra.mxu0 0.0
  %1193 = vmatprep.subr.mxu0 0.0
  %1194 = vmatpush1.msra.mxu0 0.0
  %1195 = vmatprep.subr.mxu0 0.0
  %1196 = vmatpush1.msra.mxu0 0.0
  %1197 = vmatprep.subr.mxu0 0.0
  %1198 = vmatpush1.msra.mxu0 0.0
  %1199 = vmatprep.subr.mxu0 0.0
  %1200 = vmatpush1.msra.mxu0 0.0
  %1201 = vmatprep.subr.mxu0 0.0
  %1202 = vmatpush1.msra.mxu0 0.0
  %1203 = vmatprep.subr.mxu0 0.0
  %1204 = vmatpush1.msra.mxu0 0.0
  %1205 = vmatprep.subr.mxu0 0.0
  %1206 = vmatpush1.msra.mxu0 0.0
  %1207 = vmatprep.subr.mxu0 0.0
  %1208 = vmatpush1.msra.mxu0 0.0
  %1209 = vmatprep.subr.mxu0 0.0
  %1210 = vmatpush1.msra.mxu0 0.0
  %1211 = vmatprep.subr.mxu0 0.0
  %1212 = vmatpush1.msra.mxu0 0.0
  %1213 = vmatprep.subr.mxu0 0.0
  %1214 = vmatpush1.msra.mxu0 0.0
  %1215 = vmatprep.subr.mxu0 0.0
  %1216 = vmatpush1.msra.mxu0 0.0
  %1217 = vmatprep.subr.mxu0 0.0
  %1218 = vmatpush1.msra.mxu0 0.0
  %1219 = vmatprep.subr.mxu0 0.0
  %1220 = vmatpush1.msra.mxu0 0.0
  %1221 = vmatprep.subr.mxu0 0.0
  %1222 = vmatpush1.msra.mxu0 0.0
  %1223 = vmatprep.subr.mxu0 0.0
  %1224 = vmatpush1.msra.mxu0 0.0
  %1225 = vmatprep.subr.mxu0 0.0
  %1226 = vmatpush1.msra.mxu0 0.0
  %1227 = vmatprep.subr.mxu0 0.0
  %1228 = vmatpush1.msra.mxu0 0.0
  %1229 = vmatprep.subr.mxu0 0.0
  %1230 = vmatpush1.msra.mxu0 0.0
  %1231 = vmatprep.subr.mxu0 0.0
  %1232 = vmatpush1.msra.mxu0 0.0
  %1233 = vmatprep.mubr.f32.mxu0 0.0
  %1234 = vmatmul.mubr.f32.gmra.mrb[0].mxu0 %v1167
  %v1235 = vpop.f32.mrb[0].mxu0
  %v1236 = vadd.f32 0.0, %v1235
  %v1237 = vpop.f32.mrb[0].mxu0
  %v1238 = vadd.f32 0.0, %v1237
  %1239 = vdwg.mxu0
  %1240 = vmatprep.subr.mxu0 %v1163
  %1241 = vmatpush1.msra.mxu0 %v1162
  %1242 = vmatprep.subr.mxu0 0.0
  %1243 = vmatpush1.msra.mxu0 0.0
  %1244 = vmatprep.subr.mxu0 0.0
  %1245 = vmatpush1.msra.mxu0 0.0
  %1246 = vmatprep.subr.mxu0 0.0
  %1247 = vmatpush1.msra.mxu0 0.0
  %1248 = vmatprep.subr.mxu0 0.0
  %1249 = vmatpush1.msra.mxu0 0.0
  %1250 = vmatprep.subr.mxu0 0.0
  %1251 = vmatpush1.msra.mxu0 0.0
  %1252 = vmatprep.subr.mxu0 0.0
  %1253 = vmatpush1.msra.mxu0 0.0
  %1254 = vmatprep.subr.mxu0 0.0
  %1255 = vmatpush1.msra.mxu0 0.0
  %1256 = vmatprep.subr.mxu0 0.0
  %1257 = vmatpush1.msra.mxu0 0.0
  %1258 = vmatprep.subr.mxu0 0.0
  %1259 = vmatpush1.msra.mxu0 0.0
  %1260 = vmatprep.subr.mxu0 0.0
  %1261 = vmatpush1.msra.mxu0 0.0
  %1262 = vmatprep.subr.mxu0 0.0
  %1263 = vmatpush1.msra.mxu0 0.0
  %1264 = vmatprep.subr.mxu0 0.0
  %1265 = vmatpush1.msra.mxu0 0.0
  %1266 = vmatprep.subr.mxu0 0.0
  %1267 = vmatpush1.msra.mxu0 0.0
  %1268 = vmatprep.subr.mxu0 0.0
  %1269 = vmatpush1.msra.mxu0 0.0
  %1270 = vmatprep.subr.mxu0 0.0
  %1271 = vmatpush1.msra.mxu0 0.0
  %1272 = vmatprep.subr.mxu0 0.0
  %1273 = vmatpush1.msra.mxu0 0.0
  %1274 = vmatprep.subr.mxu0 0.0
  %1275 = vmatpush1.msra.mxu0 0.0
  %1276 = vmatprep.subr.mxu0 0.0
  %1277 = vmatpush1.msra.mxu0 0.0
  %1278 = vmatprep.subr.mxu0 0.0
  %1279 = vmatpush1.msra.mxu0 0.0
  %1280 = vmatprep.subr.mxu0 0.0
  %1281 = vmatpush1.msra.mxu0 0.0
  %1282 = vmatprep.subr.mxu0 0.0
  %1283 = vmatpush1.msra.mxu0 0.0
  %1284 = vmatprep.subr.mxu0 0.0
  %1285 = vmatpush1.msra.mxu0 0.0
  %1286 = vmatprep.subr.mxu0 0.0
  %1287 = vmatpush1.msra.mxu0 0.0
  %1288 = vmatprep.subr.mxu0 0.0
  %1289 = vmatpush1.msra.mxu0 0.0
  %1290 = vmatprep.subr.mxu0 0.0
  %1291 = vmatpush1.msra.mxu0 0.0
  %1292 = vmatprep.subr.mxu0 0.0
  %1293 = vmatpush1.msra.mxu0 0.0
  %1294 = vmatprep.subr.mxu0 0.0
  %1295 = vmatpush1.msra.mxu0 0.0
  %1296 = vmatprep.subr.mxu0 0.0
  %1297 = vmatpush1.msra.mxu0 0.0
  %1298 = vmatprep.subr.mxu0 0.0
  %1299 = vmatpush1.msra.mxu0 0.0
  %1300 = vmatprep.subr.mxu0 0.0
  %1301 = vmatpush1.msra.mxu0 0.0
  %1302 = vmatprep.subr.mxu0 0.0
  %1303 = vmatpush1.msra.mxu0 0.0
  %1304 = vmatprep.mubr.f32.mxu0 0.0
  %1305 = vmatmul.mubr.f32.gmra.mrb[0].mxu0 %v1167
  %v1306 = vpop.f32.mrb[0].mxu0
  %v1307 = vadd.f32 0.0, %v1306
  %v1308 = vpop.f32.mrb[0].mxu0
  %v1309 = vadd.f32 0.0, %v1308
  %1310 = vdwg.mxu0
  %v1311 = vadd.f32 %v1156, %v1236
  %v1312 = vadd.f32 %v1157, %v1238
  %v1313 = vadd.f32 %v1158, %v1307
  %v1314 = vadd.f32 %v1159, %v1309
  %1315 = vset.pattern.permute.xlu0 3
  %1316 = vperm.xlu0 %1315, %v156
  %v1317 = vpop.permute.xlu0 %1316
  %v1319 = vadd.f32 %v1311, %v1317
  %v1320 = vadd.f32 %v1312, %v1317
  %v1321 = vadd.f32 %v1313, %v1317
  %v1322 = vadd.f32 %v1314, %v1317
  %1323 = vrot.lane.b32.xlu0 %v1319, 1
  %v1324 = vpop.permute.xlu0 %1323
  %1325 = vrot.lane.b32.xlu0 %v1320, 1
  %v1326 = vpop.permute.xlu0 %1325
  %1327 = vrot.lane.b32.xlu0 %v1321, 1
  %v1328 = vpop.permute.xlu0 %1327
  %1329 = vrot.lane.b32.xlu0 %v1322, 1
  %v1330 = vpop.permute.xlu0 %1329
  %v1331 = vsel %vm181, %v1328, %v1330
  %v1332 = vsel %vm181, %v1326, %v1328
  %v1333 = vsel %vm181, %v1324, %v1326
  %v1334 = vsel %vm181, %v1330, %v1324
  %v1335 = vsel %vm854, %v1319, %v1334
  %v1336 = vsel %vm855, %v1320, %v1333
  %v1337 = vsel %vm856, %v1321, %v1332
  %v1338 = vsel %vm857, %v1322, %v1331
  %1339 = vrot.lane.b32.xlu0 %v634, 1
  %v1340 = vpop.permute.xlu0 %1339
  %1341 = vrot.lane.b32.xlu0 %v635, 1
  %v1342 = vpop.permute.xlu0 %1341
  %1343 = vrot.lane.b32.xlu0 %v636, 1
  %v1344 = vpop.permute.xlu0 %1343
  %1345 = vrot.lane.b32.xlu0 %v637, 1
  %v1346 = vpop.permute.xlu0 %1345
  %v1347 = vsel %vm181, %v1344, %v1346
  %v1348 = vsel %vm181, %v1342, %v1344
  %v1349 = vsel %vm181, %v1340, %v1342
  %v1350 = vsel %vm181, %v1346, %v1340
  %v1351 = vsel %vm194, %v1350, 0.0
  %v1352 = vsel %vm195, %v1349, 0.0
  %v1353 = vsel %vm196, %v1348, 0.0
  %v1354 = vsel %vm197, %v1347, 0.0
  %1355 = vrot.lane.b32.xlu0 %v1335, 1
  %v1356 = vpop.permute.xlu0 %1355
  %1357 = vrot.lane.b32.xlu0 %v1336, 1
  %v1358 = vpop.permute.xlu0 %1357
  %1359 = vrot.lane.b32.xlu0 %v1337, 1
  %v1360 = vpop.permute.xlu0 %1359
  %1361 = vrot.lane.b32.xlu0 %v1338, 1
  %v1362 = vpop.permute.xlu0 %1361
  %v1363 = vsel %vm181, %v1360, %v1362
  %v1364 = vsel %vm181, %v1358, %v1360
  %v1365 = vsel %vm181, %v1356, %v1358
  %v1366 = vsel %vm181, %v1362, %v1356
  %v1367 = vsel %vm194, %v1366, 0.0
  %v1368 = vsel %vm195, %v1365, 0.0
  %v1369 = vsel %vm196, %v1364, 0.0
  %v1370 = vsel %vm197, %v1363, 0.0
  %v1371 = vsel %vm235, %v648, 0.0
  %v1372 = vsel %vm236, %v647, 0.0
  %v1373 = vsel %vm237, %v646, 0.0
  %v1374 = vsel %vm238, %v649, 0.0
  %1375 = vrot.lane.b32.xlu0 %v1335, 127
  %v1376 = vpop.permute.xlu0 %1375
  %1377 = vrot.lane.b32.xlu0 %v1336, 127
  %v1378 = vpop.permute.xlu0 %1377
  %1379 = vrot.lane.b32.xlu0 %v1337, 127
  %v1380 = vpop.permute.xlu0 %1379
  %1381 = vrot.lane.b32.xlu0 %v1338, 127
  %v1382 = vpop.permute.xlu0 %1381
  %v1383 = vsel %vm222, %v1380, %v1382
  %v1384 = vsel %vm222, %v1378, %v1380
  %v1385 = vsel %vm222, %v1376, %v1378
  %v1386 = vsel %vm222, %v1382, %v1376
  %v1387 = vsel %vm235, %v1385, 0.0
  %v1388 = vsel %vm236, %v1384, 0.0
  %v1389 = vsel %vm237, %v1383, 0.0
  %v1390 = vsel %vm238, %v1386, 0.0
  %v1391 = vld [vmem:[%s7] sm:$0xff]
  %v1393 = vsel %vm249, %v1391, 0
  %1395 = vmatprep.subr.mxu0 %v1352
  %1396 = vmatpush1.msra.mxu0 %v1351
  %1397 = vmatprep.subr.mxu0 %v1368
  %1398 = vmatpush1.msra.mxu0 %v1367
  %1399 = vmatprep.subr.mxu0 %v635
  %1400 = vmatpush1.msra.mxu0 %v634
  %1401 = vmatprep.subr.mxu0 %v1336
  %1402 = vmatpush1.msra.mxu0 %v1335
  %1403 = vmatprep.subr.mxu0 %v1372
  %1404 = vmatpush1.msra.mxu0 %v1371
  %1405 = vmatprep.subr.mxu0 %v1388
  %1406 = vmatpush1.msra.mxu0 %v1387
  %1407 = vmatprep.subr.mxu0 0.0
  %1408 = vmatpush1.msra.mxu0 0.0
  %1409 = vmatprep.subr.mxu0 0.0
  %1410 = vmatpush1.msra.mxu0 0.0
  %1411 = vmatprep.subr.mxu0 0.0
  %1412 = vmatpush1.msra.mxu0 0.0
  %1413 = vmatprep.subr.mxu0 0.0
  %1414 = vmatpush1.msra.mxu0 0.0
  %1415 = vmatprep.subr.mxu0 0.0
  %1416 = vmatpush1.msra.mxu0 0.0
  %1417 = vmatprep.subr.mxu0 0.0
  %1418 = vmatpush1.msra.mxu0 0.0
  %1419 = vmatprep.subr.mxu0 0.0
  %1420 = vmatpush1.msra.mxu0 0.0
  %1421 = vmatprep.subr.mxu0 0.0
  %1422 = vmatpush1.msra.mxu0 0.0
  %1423 = vmatprep.subr.mxu0 0.0
  %1424 = vmatpush1.msra.mxu0 0.0
  %1425 = vmatprep.subr.mxu0 0.0
  %1426 = vmatpush1.msra.mxu0 0.0
  %1427 = vmatprep.subr.mxu0 0.0
  %1428 = vmatpush1.msra.mxu0 0.0
  %1429 = vmatprep.subr.mxu0 0.0
  %1430 = vmatpush1.msra.mxu0 0.0
  %1431 = vmatprep.subr.mxu0 0.0
  %1432 = vmatpush1.msra.mxu0 0.0
  %1433 = vmatprep.subr.mxu0 0.0
  %1434 = vmatpush1.msra.mxu0 0.0
  %1435 = vmatprep.subr.mxu0 0.0
  %1436 = vmatpush1.msra.mxu0 0.0
  %1437 = vmatprep.subr.mxu0 0.0
  %1438 = vmatpush1.msra.mxu0 0.0
  %1439 = vmatprep.subr.mxu0 0.0
  %1440 = vmatpush1.msra.mxu0 0.0
  %1441 = vmatprep.subr.mxu0 0.0
  %1442 = vmatpush1.msra.mxu0 0.0
  %1443 = vmatprep.subr.mxu0 0.0
  %1444 = vmatpush1.msra.mxu0 0.0
  %1445 = vmatprep.subr.mxu0 0.0
  %1446 = vmatpush1.msra.mxu0 0.0
  %1447 = vmatprep.subr.mxu0 0.0
  %1448 = vmatpush1.msra.mxu0 0.0
  %1449 = vmatprep.subr.mxu0 0.0
  %1450 = vmatpush1.msra.mxu0 0.0
  %1451 = vmatprep.subr.mxu0 0.0
  %1452 = vmatpush1.msra.mxu0 0.0
  %1453 = vmatprep.subr.mxu0 0.0
  %1454 = vmatpush1.msra.mxu0 0.0
  %1455 = vmatprep.subr.mxu0 0.0
  %1456 = vmatpush1.msra.mxu0 0.0
  %1457 = vmatprep.subr.mxu0 0.0
  %1458 = vmatpush1.msra.mxu0 0.0
  %1459 = vmatprep.mubr.f32.mxu0 0.0
  %1460 = vmatmul.mubr.f32.gmra.mrb[0].mxu0 %v1393
  %v1461 = vpop.f32.mrb[0].mxu0
  %v1462 = vadd.f32 0.0, %v1461
  %v1463 = vpop.f32.mrb[0].mxu0
  %v1464 = vadd.f32 0.0, %v1463
  %1465 = vdwg.mxu0
  %1466 = vmatprep.subr.mxu0 %v1354
  %1467 = vmatpush1.msra.mxu0 %v1353
  %1468 = vmatprep.subr.mxu0 %v1370
  %1469 = vmatpush1.msra.mxu0 %v1369
  %1470 = vmatprep.subr.mxu0 %v637
  %1471 = vmatpush1.msra.mxu0 %v636
  %1472 = vmatprep.subr.mxu0 %v1338
  %1473 = vmatpush1.msra.mxu0 %v1337
  %1474 = vmatprep.subr.mxu0 %v1374
  %1475 = vmatpush1.msra.mxu0 %v1373
  %1476 = vmatprep.subr.mxu0 %v1390
  %1477 = vmatpush1.msra.mxu0 %v1389
  %1478 = vmatprep.subr.mxu0 0.0
  %1479 = vmatpush1.msra.mxu0 0.0
  %1480 = vmatprep.subr.mxu0 0.0
  %1481 = vmatpush1.msra.mxu0 0.0
  %1482 = vmatprep.subr.mxu0 0.0
  %1483 = vmatpush1.msra.mxu0 0.0
  %1484 = vmatprep.subr.mxu0 0.0
  %1485 = vmatpush1.msra.mxu0 0.0
  %1486 = vmatprep.subr.mxu0 0.0
  %1487 = vmatpush1.msra.mxu0 0.0
  %1488 = vmatprep.subr.mxu0 0.0
  %1489 = vmatpush1.msra.mxu0 0.0
  %1490 = vmatprep.subr.mxu0 0.0
  %1491 = vmatpush1.msra.mxu0 0.0
  %1492 = vmatprep.subr.mxu0 0.0
  %1493 = vmatpush1.msra.mxu0 0.0
  %1494 = vmatprep.subr.mxu0 0.0
  %1495 = vmatpush1.msra.mxu0 0.0
  %1496 = vmatprep.subr.mxu0 0.0
  %1497 = vmatpush1.msra.mxu0 0.0
  %1498 = vmatprep.subr.mxu0 0.0
  %1499 = vmatpush1.msra.mxu0 0.0
  %1500 = vmatprep.subr.mxu0 0.0
  %1501 = vmatpush1.msra.mxu0 0.0
  %1502 = vmatprep.subr.mxu0 0.0
  %1503 = vmatpush1.msra.mxu0 0.0
  %1504 = vmatprep.subr.mxu0 0.0
  %1505 = vmatpush1.msra.mxu0 0.0
  %1506 = vmatprep.subr.mxu0 0.0
  %1507 = vmatpush1.msra.mxu0 0.0
  %1508 = vmatprep.subr.mxu0 0.0
  %1509 = vmatpush1.msra.mxu0 0.0
  %1510 = vmatprep.subr.mxu0 0.0
  %1511 = vmatpush1.msra.mxu0 0.0
  %1512 = vmatprep.subr.mxu0 0.0
  %1513 = vmatpush1.msra.mxu0 0.0
  %1514 = vmatprep.subr.mxu0 0.0
  %1515 = vmatpush1.msra.mxu0 0.0
  %1516 = vmatprep.subr.mxu0 0.0
  %1517 = vmatpush1.msra.mxu0 0.0
  %1518 = vmatprep.subr.mxu0 0.0
  %1519 = vmatpush1.msra.mxu0 0.0
  %1520 = vmatprep.subr.mxu0 0.0
  %1521 = vmatpush1.msra.mxu0 0.0
  %1522 = vmatprep.subr.mxu0 0.0
  %1523 = vmatpush1.msra.mxu0 0.0
  %1524 = vmatprep.subr.mxu0 0.0
  %1525 = vmatpush1.msra.mxu0 0.0
  %1526 = vmatprep.subr.mxu0 0.0
  %1527 = vmatpush1.msra.mxu0 0.0
  %1528 = vmatprep.subr.mxu0 0.0
  %1529 = vmatpush1.msra.mxu0 0.0
  %1530 = vmatprep.mubr.f32.mxu0 0.0
  %1531 = vmatmul.mubr.f32.gmra.mrb[0].mxu0 %v1393
  %v1532 = vpop.f32.mrb[0].mxu0
  %v1533 = vadd.f32 0.0, %v1532
  %v1534 = vpop.f32.mrb[0].mxu0
  %v1535 = vadd.f32 0.0, %v1534
  %1536 = vdwg.mxu0
  %v1537 = vadd.f32 %v1462, %v1464
  %v1538 = vadd.f32 %v1537, %v1533
  %v1539 = vadd.f32 %v1538, %v1535
  %1540 = vadd.xlane.f32.xlu0 %v1539
  %v1541 = vpop.xlane.xlu0 %1540
  %v1542 = vmul.f32 %v1462, %v1462
  %v1543 = vmul.f32 %v1464, %v1464
  %v1544 = vmul.f32 %v1533, %v1533
  %v1545 = vmul.f32 %v1535, %v1535
  %v1546 = vadd.f32 %v1542, %v1543
  %v1547 = vadd.f32 %v1546, %v1544
  %v1548 = vadd.f32 %v1547, %v1545
  %1549 = vadd.xlane.f32.xlu0 %v1548
  %v1550 = vpop.xlane.xlu0 %1549
  %v1551 = vmul.f32 %v1541, 0.001953125
  %v1552 = vmul.f32 %v1550, 0.001953125
  %v1553 = vmul.f32 %v1551, %v1551
  %v1554 = vsub.f32 %v1552, %v1553
  %v1555 = vmax.f32 %v1554, 0.0
  %v1556 = vadd.f32 %v1555, 1e-05
  %v1557 = vrsqrt.pop %v1556
  %v1558 = vmul.f32 %v156, %v1557
  %v1559 = vmul.f32 %v1551, %v1558
  %1561 = vrot.lane.b32.xlu0 %v1559, 1
  %v1562 = vpop.permute.xlu0 %1561
  %v1564 = vsub.f32 %v156, %v1562
  %1566 = vset.pattern.permute.xlu0 8
  %1567 = vperm.xlu0 %1566, %v1558
  %v1568 = vpop.permute.xlu0 %1567
  %v1570 = vmul.f32 %v1462, %v1568
  %v1571 = vmul.f32 %v1464, %v1568
  %v1572 = vmul.f32 %v1533, %v1568
  %v1573 = vmul.f32 %v1535, %v1568
  %1575 = vset.pattern.permute.xlu0 9
  %1576 = vperm.xlu0 %1575, %v1564
  %v1577 = vpop.permute.xlu0 %1576
  %v1579 = vadd.f32 %v1570, %v1577
  %v1580 = vadd.f32 %v1571, %v1577
  %v1581 = vadd.f32 %v1572, %v1577
  %v1582 = vadd.f32 %v1573, %v1577
  %vm1583 = vcmp.gt.f32.partialorder %v1579, 0.0
  %vm1584 = vcmp.gt.f32.partialorder %v1580, 0.0
  %vm1585 = vcmp.gt.f32.partialorder %v1581, 0.0
  %vm1586 = vcmp.gt.f32.partialorder %v1582, 0.0
  %v1587 = vmul.f32 %v1579, 0.2
  %v1588 = vmul.f32 %v1580, 0.2
  %v1589 = vmul.f32 %v1581, 0.2
  %v1590 = vmul.f32 %v1582, 0.2
  %v1591 = vsel %vm1583, %v1579, %v1587
  %v1592 = vsel %vm1584, %v1580, %v1588
  %v1593 = vsel %vm1585, %v1581, %v1589
  %v1594 = vsel %vm1586, %v1582, %v1590
  %1595 = vrot.lane.b32.xlu0 %v1591, 1
  %v1596 = vpop.permute.xlu0 %1595
  %1597 = vrot.lane.b32.xlu0 %v1592, 1
  %v1598 = vpop.permute.xlu0 %1597
  %1599 = vrot.lane.b32.xlu0 %v1593, 1
  %v1600 = vpop.permute.xlu0 %1599
  %1601 = vrot.lane.b32.xlu0 %v1594, 1
  %v1602 = vpop.permute.xlu0 %1601
  %v1603 = vsel %vm181, %v1600, %v1602
  %v1604 = vsel %vm181, %v1598, %v1600
  %v1605 = vsel %vm181, %v1596, %v1598
  %v1606 = vsel %vm181, %v1602, %v1596
  %v1607 = vsel %vm194, %v1606, 0.0
  %v1608 = vsel %vm195, %v1605, 0.0
  %v1609 = vsel %vm196, %v1604, 0.0
  %v1610 = vsel %vm197, %v1603, 0.0
  %1611 = vrot.lane.b32.xlu0 %v1591, 127
  %v1612 = vpop.permute.xlu0 %1611
  %1613 = vrot.lane.b32.xlu0 %v1592, 127
  %v1614 = vpop.permute.xlu0 %1613
  %1615 = vrot.lane.b32.xlu0 %v1593, 127
  %v1616 = vpop.permute.xlu0 %1615
  %1617 = vrot.lane.b32.xlu0 %v1594, 127
  %v1618 = vpop.permute.xlu0 %1617
  %v1619 = vsel %vm222, %v1616, %v1618
  %v1620 = vsel %vm222, %v1614, %v1616
  %v1621 = vsel %vm222, %v1612, %v1614
  %v1622 = vsel %vm222, %v1618, %v1612
  %v1623 = vsel %vm235, %v1621, 0.0
  %v1624 = vsel %vm236, %v1620, 0.0
  %v1625 = vsel %vm237, %v1619, 0.0
  %v1626 = vsel %vm238, %v1622, 0.0
  %v1627 = vld [vmem:[%s8] sm:$0xff]
  %v1629 = vsel %vm476, %v1627, 0
  %1631 = vmatprep.subr.mxu0 %v1608
  %1632 = vmatpush1.msra.mxu0 %v1607
  %1633 = vmatprep.subr.mxu0 %v1592
  %1634 = vmatpush1.msra.mxu0 %v1591
  %1635 = vmatprep.subr.mxu0 %v1624
  %1636 = vmatpush1.msra.mxu0 %v1623
  %1637 = vmatprep.subr.mxu0 0.0
  %1638 = vmatpush1.msra.mxu0 0.0
  %1639 = vmatprep.subr.mxu0 0.0
  %1640 = vmatpush1.msra.mxu0 0.0
  %1641 = vmatprep.subr.mxu0 0.0
  %1642 = vmatpush1.msra.mxu0 0.0
  %1643 = vmatprep.subr.mxu0 0.0
  %1644 = vmatpush1.msra.mxu0 0.0
  %1645 = vmatprep.subr.mxu0 0.0
  %1646 = vmatpush1.msra.mxu0 0.0
  %1647 = vmatprep.subr.mxu0 0.0
  %1648 = vmatpush1.msra.mxu0 0.0
  %1649 = vmatprep.subr.mxu0 0.0
  %1650 = vmatpush1.msra.mxu0 0.0
  %1651 = vmatprep.subr.mxu0 0.0
  %1652 = vmatpush1.msra.mxu0 0.0
  %1653 = vmatprep.subr.mxu0 0.0
  %1654 = vmatpush1.msra.mxu0 0.0
  %1655 = vmatprep.subr.mxu0 0.0
  %1656 = vmatpush1.msra.mxu0 0.0
  %1657 = vmatprep.subr.mxu0 0.0
  %1658 = vmatpush1.msra.mxu0 0.0
  %1659 = vmatprep.subr.mxu0 0.0
  %1660 = vmatpush1.msra.mxu0 0.0
  %1661 = vmatprep.subr.mxu0 0.0
  %1662 = vmatpush1.msra.mxu0 0.0
  %1663 = vmatprep.subr.mxu0 0.0
  %1664 = vmatpush1.msra.mxu0 0.0
  %1665 = vmatprep.subr.mxu0 0.0
  %1666 = vmatpush1.msra.mxu0 0.0
  %1667 = vmatprep.subr.mxu0 0.0
  %1668 = vmatpush1.msra.mxu0 0.0
  %1669 = vmatprep.subr.mxu0 0.0
  %1670 = vmatpush1.msra.mxu0 0.0
  %1671 = vmatprep.subr.mxu0 0.0
  %1672 = vmatpush1.msra.mxu0 0.0
  %1673 = vmatprep.subr.mxu0 0.0
  %1674 = vmatpush1.msra.mxu0 0.0
  %1675 = vmatprep.subr.mxu0 0.0
  %1676 = vmatpush1.msra.mxu0 0.0
  %1677 = vmatprep.subr.mxu0 0.0
  %1678 = vmatpush1.msra.mxu0 0.0
  %1679 = vmatprep.subr.mxu0 0.0
  %1680 = vmatpush1.msra.mxu0 0.0
  %1681 = vmatprep.subr.mxu0 0.0
  %1682 = vmatpush1.msra.mxu0 0.0
  %1683 = vmatprep.subr.mxu0 0.0
  %1684 = vmatpush1.msra.mxu0 0.0
  %1685 = vmatprep.subr.mxu0 0.0
  %1686 = vmatpush1.msra.mxu0 0.0
  %1687 = vmatprep.subr.mxu0 0.0
  %1688 = vmatpush1.msra.mxu0 0.0
  %1689 = vmatprep.subr.mxu0 0.0
  %1690 = vmatpush1.msra.mxu0 0.0
  %1691 = vmatprep.subr.mxu0 0.0
  %1692 = vmatpush1.msra.mxu0 0.0
  %1693 = vmatprep.subr.mxu0 0.0
  %1694 = vmatpush1.msra.mxu0 0.0
  %1695 = vmatprep.mubr.f32.mxu0 0.0
  %1696 = vmatmul.mubr.f32.gmra.mrb[0].mxu0 %v1629
  %v1697 = vpop.f32.mrb[0].mxu0
  %v1698 = vadd.f32 0.0, %v1697
  %v1699 = vpop.f32.mrb[0].mxu0
  %v1700 = vadd.f32 0.0, %v1699
  %1701 = vdwg.mxu0
  %1702 = vmatprep.subr.mxu0 %v1610
  %1703 = vmatpush1.msra.mxu0 %v1609
  %1704 = vmatprep.subr.mxu0 %v1594
  %1705 = vmatpush1.msra.mxu0 %v1593
  %1706 = vmatprep.subr.mxu0 %v1626
  %1707 = vmatpush1.msra.mxu0 %v1625
  %1708 = vmatprep.subr.mxu0 0.0
  %1709 = vmatpush1.msra.mxu0 0.0
  %1710 = vmatprep.subr.mxu0 0.0
  %1711 = vmatpush1.msra.mxu0 0.0
  %1712 = vmatprep.subr.mxu0 0.0
  %1713 = vmatpush1.msra.mxu0 0.0
  %1714 = vmatprep.subr.mxu0 0.0
  %1715 = vmatpush1.msra.mxu0 0.0
  %1716 = vmatprep.subr.mxu0 0.0
  %1717 = vmatpush1.msra.mxu0 0.0
  %1718 = vmatprep.subr.mxu0 0.0
  %1719 = vmatpush1.msra.mxu0 0.0
  %1720 = vmatprep.subr.mxu0 0.0
  %1721 = vmatpush1.msra.mxu0 0.0
  %1722 = vmatprep.subr.mxu0 0.0
  %1723 = vmatpush1.msra.mxu0 0.0
  %1724 = vmatprep.subr.mxu0 0.0
  %1725 = vmatpush1.msra.mxu0 0.0
  %1726 = vmatprep.subr.mxu0 0.0
  %1727 = vmatpush1.msra.mxu0 0.0
  %1728 = vmatprep.subr.mxu0 0.0
  %1729 = vmatpush1.msra.mxu0 0.0
  %1730 = vmatprep.subr.mxu0 0.0
  %1731 = vmatpush1.msra.mxu0 0.0
  %1732 = vmatprep.subr.mxu0 0.0
  %1733 = vmatpush1.msra.mxu0 0.0
  %1734 = vmatprep.subr.mxu0 0.0
  %1735 = vmatpush1.msra.mxu0 0.0
  %1736 = vmatprep.subr.mxu0 0.0
  %1737 = vmatpush1.msra.mxu0 0.0
  %1738 = vmatprep.subr.mxu0 0.0
  %1739 = vmatpush1.msra.mxu0 0.0
  %1740 = vmatprep.subr.mxu0 0.0
  %1741 = vmatpush1.msra.mxu0 0.0
  %1742 = vmatprep.subr.mxu0 0.0
  %1743 = vmatpush1.msra.mxu0 0.0
  %1744 = vmatprep.subr.mxu0 0.0
  %1745 = vmatpush1.msra.mxu0 0.0
  %1746 = vmatprep.subr.mxu0 0.0
  %1747 = vmatpush1.msra.mxu0 0.0
  %1748 = vmatprep.subr.mxu0 0.0
  %1749 = vmatpush1.msra.mxu0 0.0
  %1750 = vmatprep.subr.mxu0 0.0
  %1751 = vmatpush1.msra.mxu0 0.0
  %1752 = vmatprep.subr.mxu0 0.0
  %1753 = vmatpush1.msra.mxu0 0.0
  %1754 = vmatprep.subr.mxu0 0.0
  %1755 = vmatpush1.msra.mxu0 0.0
  %1756 = vmatprep.subr.mxu0 0.0
  %1757 = vmatpush1.msra.mxu0 0.0
  %1758 = vmatprep.subr.mxu0 0.0
  %1759 = vmatpush1.msra.mxu0 0.0
  %1760 = vmatprep.subr.mxu0 0.0
  %1761 = vmatpush1.msra.mxu0 0.0
  %1762 = vmatprep.subr.mxu0 0.0
  %1763 = vmatpush1.msra.mxu0 0.0
  %1764 = vmatprep.subr.mxu0 0.0
  %1765 = vmatpush1.msra.mxu0 0.0
  %1766 = vmatprep.mubr.f32.mxu0 0.0
  %1767 = vmatmul.mubr.f32.gmra.mrb[0].mxu0 %v1629
  %v1768 = vpop.f32.mrb[0].mxu0
  %v1769 = vadd.f32 0.0, %v1768
  %v1770 = vpop.f32.mrb[0].mxu0
  %v1771 = vadd.f32 0.0, %v1770
  %1772 = vdwg.mxu0
  %v1773 = vadd.f32 %v1698, %v1700
  %v1774 = vadd.f32 %v1773, %v1769
  %v1775 = vadd.f32 %v1774, %v1771
  %1776 = vadd.xlane.f32.xlu0 %v1775
  %v1777 = vpop.xlane.xlu0 %1776
  %v1778 = vmul.f32 %v1698, %v1698
  %v1779 = vmul.f32 %v1700, %v1700
  %v1780 = vmul.f32 %v1769, %v1769
  %v1781 = vmul.f32 %v1771, %v1771
  %v1782 = vadd.f32 %v1778, %v1779
  %v1783 = vadd.f32 %v1782, %v1780
  %v1784 = vadd.f32 %v1783, %v1781
  %1785 = vadd.xlane.f32.xlu0 %v1784
  %v1786 = vpop.xlane.xlu0 %1785
  %v1787 = vmul.f32 %v1777, 0.001953125
  %v1788 = vmul.f32 %v1786, 0.001953125
  %v1789 = vmul.f32 %v1787, %v1787
  %v1790 = vsub.f32 %v1788, %v1789
  %v1791 = vmax.f32 %v1790, 0.0
  %v1792 = vadd.f32 %v1791, 1e-05
  %v1793 = vrsqrt.pop %v1792
  %v1794 = vmul.f32 %v156, %v1793
  %v1795 = vmul.f32 %v1787, %v1794
  %1797 = vrot.lane.b32.xlu0 %v1795, 1
  %v1798 = vpop.permute.xlu0 %1797
  %v1800 = vsub.f32 %v156, %v1798
  %1802 = vset.pattern.permute.xlu0 10
  %1803 = vperm.xlu0 %1802, %v1794
  %v1804 = vpop.permute.xlu0 %1803
  %v1806 = vmul.f32 %v1698, %v1804
  %v1807 = vmul.f32 %v1700, %v1804
  %v1808 = vmul.f32 %v1769, %v1804
  %v1809 = vmul.f32 %v1771, %v1804
  %1811 = vset.pattern.permute.xlu0 11
  %1812 = vperm.xlu0 %1811, %v1800
  %v1813 = vpop.permute.xlu0 %1812
  %v1815 = vadd.f32 %v1806, %v1813
  %v1816 = vadd.f32 %v1807, %v1813
  %v1817 = vadd.f32 %v1808, %v1813
  %v1818 = vadd.f32 %v1809, %v1813
  %vm1819 = vcmp.gt.f32.partialorder %v1815, 0.0
  %vm1820 = vcmp.gt.f32.partialorder %v1816, 0.0
  %vm1821 = vcmp.gt.f32.partialorder %v1817, 0.0
  %vm1822 = vcmp.gt.f32.partialorder %v1818, 0.0
  %v1823 = vmul.f32 %v1815, 0.2
  %v1824 = vmul.f32 %v1816, 0.2
  %v1825 = vmul.f32 %v1817, 0.2
  %v1826 = vmul.f32 %v1818, 0.2
  %v1827 = vsel %vm1819, %v1815, %v1823
  %v1828 = vsel %vm1820, %v1816, %v1824
  %v1829 = vsel %vm1821, %v1817, %v1825
  %v1830 = vsel %vm1822, %v1818, %v1826
  %1831 = vst [vmem:[%s10] sm:$0xff] %v1827
  %1832 = vst [vmem:[%s10 + $0x8] sm:$0xff] %v1828
  %1833 = vst [vmem:[%s10 + $0x10] sm:$0xff] %v1829
  %1834 = vst [vmem:[%s10 + $0x18] sm:$0xff] %v1830
  // Predicated region
  $region42: #{trunc_residual_block_forward.1} parent=0 // pred_check
    _
  $region43: #{trunc_residual_block_forward.1} parent=0 // pred_check_branch
    %1836 = sbr.rel (0) target = $region45
  $region44: #{trunc_residual_block_forward.1} parent=0 // pred_region
    _
  $region45: #{trunc_residual_block_forward.1} parent=0 // pred_fallthru
    _
  // Predicated region
  $region46: #{trunc_residual_block_forward.1} parent=0 // pred_check
    _
  $region47: #{trunc_residual_block_forward.1} parent=0 // pred_check_branch
    %1838 = sbr.rel (0) target = $region49
  $region48: #{trunc_residual_block_forward.1} parent=0 // pred_region
    _
  $region49: #{trunc_residual_block_forward.1} parent=0 // pred_fallthru
    _

</llo_original>
